<compile_context>
chip_gen: v7x
topology: tpu7x:2x2x1
jax: 0.10.0
libtpu: 0.0.40
codegen_flags: <defaults>
</compile_context>

<pallas_src>
import functools

import jax
import jax.numpy as jnp
from jax.experimental import pallas as pl
from jax.experimental.pallas import tpu as pltpu

# ---- spline activation configuration (static) ----
SPLINE_K = 9                                # coefficients / knots per activation unit
SPLINE_RANGE = 4.0                          # knots span [-SPLINE_RANGE, SPLINE_RANGE]
SPLINE_H = 2.0 * SPLINE_RANGE / (SPLINE_K - 1)
SPLINE_MIN = -SPLINE_RANGE
INV_H = 1.0 / SPLINE_H

FEAT = 784
FEAT_PAD = 896                              # 7 * 128 -> lane-aligned x tile / fc1 K dim
LOGIT_PAD = 128                             # lane-dense logits / output slab
NEG_BIG = -1e30                             # pad-lane bias -> excluded from log_softmax


def _spline_compute_dtype():
    """bf16 spline accumulation on bf16-VPU chips (v6e/v7x); f32 on older gens (v5e etc.)."""
    try:
        kind = jax.devices()[0].device_kind.lower()
    except Exception:
        return jnp.bfloat16
    if any(g in kind for g in ("v2", "v3", "v4", "v5")):
        return jnp.float32
    return jnp.bfloat16


def _spline_relu_basis(h, p_ref, compute_dtype):
    """Degree-1 B-spline activation in the ReLU basis, Linear bias folded in.

    h:      (TB, C) f32 pre-bias matmul output.
    p_ref:  (3 + K-2, C) f32 packed params, rows = [off, a0, s0, d_1..d_{K-2}] with
            off = (bias - SPLINE_MIN)/h_step, a0 = c_0, s0 = c_1 - c_0,
            d_k = c_{k+1} - 2 c_k + c_{k-1}.
    Returns bf16 (feeds the next bf16 MXU matmul directly).
    """
    p = p_ref[...]                                                   # one load, slice in-register
    t = jnp.clip(h * INV_H + p[0:1, :], 0.0, float(SPLINE_K - 1))    # knot coord, f32 clip
    t = t.astype(compute_dtype)
    pc = p[1:, :].astype(compute_dtype)                              # [a0, s0, d_1..d_{K-2}]
    y = pc[0:1, :] + pc[1:2, :] * t
    for k in range(1, SPLINE_K - 1):                                 # 7 terms, unrolled at trace
        y = y + pc[k + 1:k + 2, :] * jnp.maximum(t - float(k), 0.0)
    return y.astype(jnp.bfloat16)


def mlp_kernel(x_ref,
               w1_ref, p1_ref,
               w2_ref, p2_ref,
               w3_ref, p3_ref,
               w4_ref, b4_ref,
               o_ref, *, spline_dtype):
    x = x_ref[...]                                                        # (TB, 896) bf16

    h1 = jnp.dot(x, w1_ref[...], preferred_element_type=jnp.float32)     # (TB, 256) f32
    a1 = _spline_relu_basis(h1, p1_ref, spline_dtype)                    # (TB, 256) bf16

    h2 = jnp.dot(a1, w2_ref[...], preferred_element_type=jnp.float32)    # (TB, 128)
    a2 = _spline_relu_basis(h2, p2_ref, spline_dtype)

    h3 = jnp.dot(a2, w3_ref[...], preferred_element_type=jnp.float32)    # (TB, 64)
    a3 = _spline_relu_basis(h3, p3_ref, spline_dtype)

    logits = jnp.dot(a3, w4_ref[...], preferred_element_type=jnp.float32)  # (TB, 128) lane-dense
    logits = logits + b4_ref[...]        # pad lanes get -1e30 -> vanish in the softmax

    # log_softmax along dim=1 in f32 (pad lanes contribute exp(~-1e30) = 0)
    z = logits - jnp.max(logits, axis=-1, keepdims=True)
    lse = jnp.log(jnp.sum(jnp.exp(z), axis=-1, keepdims=True))
    o_ref[...] = (z - lse).astype(o_ref.dtype)


def _pack_spline_params(bias, coeffs):
    """Fold Linear bias + hat-basis coefficients into one (3+K-2, C) ReLU-basis param pack."""
    bias = bias.astype(jnp.float32).reshape(1, -1)
    coeffs = coeffs.astype(jnp.float32)
    off = (bias - SPLINE_MIN) * INV_H                                  # (1, C)
    a0 = coeffs[0:1, :]                                                # (1, C)
    s0 = coeffs[1:2, :] - coeffs[0:1, :]                               # (1, C)
    d = coeffs[2:, :] - 2.0 * coeffs[1:-1, :] + coeffs[:-2, :]         # (K-2, C)
    return jnp.concatenate([off, a0, s0, d], axis=0)                   # (10, C)


def mlp_forward(x, params, *, tb_max=1024, interpret=False):
    """Whole MLP forward pass as a single batch-tiled Pallas kernel."""
    B = x.shape[0]
    x2 = x.reshape(B, -1)                           # mirrors x.view(x.shape[0], -1)
    assert x2.shape[1] == FEAT

    # ---- batch tiling: multiple-of-8 rows; keep >= 2 grid steps when possible so the
    # "parallel" batch axis can shard across v7x's two TensorCores, balanced tile sizes ----
    b_pad8 = -(-B // 8) * 8
    n_tiles = max(1, -(-b_pad8 // tb_max))
    if b_pad8 >= 16:
        n_tiles = max(2, n_tiles)
    rows_per_tile = -(-b_pad8 // n_tiles)
    tb = -(-rows_per_tile // 8) * 8
    b_pad = n_tiles * tb

    # Single cast + single pad pass over x (rows and feature columns padded together).
    x_bf16 = x2.astype(jnp.bfloat16)
    if b_pad != B or FEAT_PAD != FEAT:
        x_bf16 = jnp.pad(x_bf16, ((0, b_pad - B), (0, FEAT_PAD - FEAT)))

    # ---- bf16 weights (halves weight DMA), f32 bias / spline param packs ----
    w1 = jnp.pad(params['w1'], ((0, FEAT_PAD - FEAT), (0, 0))).astype(jnp.bfloat16)
    w2 = params['w2'].astype(jnp.bfloat16)
    w3 = params['w3'].astype(jnp.bfloat16)
    w4 = jnp.pad(params['w4'], ((0, 0), (0, LOGIT_PAD - 10))).astype(jnp.bfloat16)
    b4 = jnp.pad(params['b4'].astype(jnp.float32), ((0, 0), (0, LOGIT_PAD - 10)),
                 constant_values=NEG_BIG)

    p1 = _pack_spline_params(params['b1'], params['c1'])
    p2 = _pack_spline_params(params['b2'], params['c2'])
    p3 = _pack_spline_params(params['b3'], params['c3'])

    args = (x_bf16, w1, p1, w2, p2, w3, p3, w4, b4)

    # x / out tiled over batch; every parameter has a constant block index -> fetched once,
    # VMEM-resident across all grid steps.
    in_specs = [pl.BlockSpec((tb, FEAT_PAD), lambda i: (i, 0))]
    for a in args[1:]:
        in_specs.append(pl.BlockSpec(a.shape, lambda i: (0, 0)))

    grid_spec = pltpu.PrefetchScalarGridSpec(
        num_scalar_prefetch=0,
        grid=(b_pad // tb,),
        in_specs=in_specs,
        out_specs=pl.BlockSpec((tb, LOGIT_PAD), lambda i: (i, 0)),
    )

    kernel = functools.partial(mlp_kernel, spline_dtype=_spline_compute_dtype())

    out = pl.pallas_call(
        kernel,
        out_shape=jax.ShapeDtypeStruct((b_pad, LOGIT_PAD), jnp.bfloat16),
        grid_spec=grid_spec,
        compiler_params=pltpu.CompilerParams(
            dimension_semantics=("parallel",),       # megacore batch sharding on v7x
            vmem_limit_bytes=32 * 1024 * 1024,       # safe on v5e/v6e/v7x
        ),
        interpret=interpret,
    )(*args)

    return out[:B, :10].astype(jnp.float32)


def init_params(key):
    """Deterministic parameter init (PyTorch nn.Linear-style uniform bounds)."""
    dims = [(784, 256), (256, 128), (128, 64), (64, 10)]
    params = {}
    keys = jax.random.split(key, len(dims))
    for i, ((fin, fout), k) in enumerate(zip(dims, keys), start=1):
        kw, kb = jax.random.split(k)
        bound = 1.0 / (fin ** 0.5)
        params[f'w{i}'] = jax.random.uniform(kw, (fin, fout), jnp.float32, -bound, bound)
        params[f'b{i}'] = jax.random.uniform(kb, (1, fout), jnp.float32, -bound, bound)

    # B-spline coefficients: ReLU sampled at the knots, shared init across channels.
    knots = SPLINE_MIN + SPLINE_H * jnp.arange(SPLINE_K, dtype=jnp.float32)
    relu_at_knots = jnp.maximum(knots, 0.0)                            # (K,)
    for idx, c in zip((1, 2, 3), (256, 128, 64)):
        params[f'c{idx}'] = jnp.tile(relu_at_knots[:, None], (1, c))   # (K, C)
    return params


def _reference_forward(x, params):
    """Pure-JAX reference (original hat-basis spline in f32), bf16 matmuls like the kernel."""
    def spline_hat(h, coeffs):
        xc = jnp.clip(h, SPLINE_MIN, SPLINE_MIN + SPLINE_H * (SPLINE_K - 1))
        t = (xc - SPLINE_MIN) * INV_H
        out = jnp.zeros_like(h)
        for k in range(SPLINE_K):
            out = out + jnp.maximum(0.0, 1.0 - jnp.abs(t - float(k))) * coeffs[k:k + 1, :]
        return out

    h = x.reshape(x.shape[0], -1).astype(jnp.bfloat16)
    for i in (1, 2, 3):
        h = jnp.dot(h, params[f'w{i}'].astype(jnp.bfloat16),
                    preferred_element_type=jnp.float32) + params[f'b{i}']
        h = spline_hat(h, params[f'c{i}']).astype(jnp.bfloat16)
    logits = jnp.dot(h, params['w4'].astype(jnp.bfloat16),
                     preferred_element_type=jnp.float32) + params['b4']
    return jax.nn.log_softmax(logits, axis=-1)


if __name__ == "__main__":
    key = jax.random.PRNGKey(0)
    pkey, xkey = jax.random.split(key)

    params = init_params(pkey)
    # Input consistent with the 784-feature flatten (MNIST-like NCHW images), small batch.
    x = jax.random.normal(xkey, (8, 1, 28, 28), jnp.float32)

    out = mlp_forward(x, params)
    out = jax.block_until_ready(out)

    assert out.shape == (8, 10)
    # log_softmax rows must exponentiate-and-sum to ~1 (bf16 output storage -> looser atol)
    assert jnp.allclose(jnp.sum(jnp.exp(out), axis=1), 1.0, atol=1e-2)
    # matches the pure-JAX (f32 hat-basis) reference within bf16 tolerance
    ref = _reference_forward(x, params)
    assert jnp.allclose(out, ref, atol=3e-2, rtol=3e-2)
    print("KERNEL_OK")
</pallas_src>

<mosaic_0001>
module attributes {stable_mosaic.version = 11 : i64} {
  func.func @mlp_kernel(%arg0: i32, %arg1: memref<8x896xbf16, #tpu.memory_space<vmem>>, %arg2: memref<896x256xbf16, #tpu.memory_space<vmem>>, %arg3: memref<10x256xf32, #tpu.memory_space<vmem>>, %arg4: memref<256x128xbf16, #tpu.memory_space<vmem>>, %arg5: memref<10x128xf32, #tpu.memory_space<vmem>>, %arg6: memref<128x64xbf16, #tpu.memory_space<vmem>>, %arg7: memref<10x64xf32, #tpu.memory_space<vmem>>, %arg8: memref<64x128xbf16, #tpu.memory_space<vmem>>, %arg9: memref<1x128xf32, #tpu.memory_space<vmem>>, %arg10: memref<8x128xbf16, #tpu.memory_space<vmem>>) attributes {dimension_semantics = [#tpu.dimension_semantics<parallel>], iteration_bounds = array<i64: 1>, scalar_prefetch = 0 : i64, scratch_operands = 0 : i64, tpu.core_type = #tpu.core_type<tc>, window_params = [{transform_indices = @transform_0, window_bounds = array<i64: 8, 896>}, {pipeline_mode = #tpu.pipeline_mode<synchronous>, transform_indices = @transform_1, window_bounds = array<i64: 896, 256>}, {pipeline_mode = #tpu.pipeline_mode<synchronous>, transform_indices = @transform_2, window_bounds = array<i64: 10, 256>}, {pipeline_mode = #tpu.pipeline_mode<synchronous>, transform_indices = @transform_3, window_bounds = array<i64: 256, 128>}, {pipeline_mode = #tpu.pipeline_mode<synchronous>, transform_indices = @transform_4, window_bounds = array<i64: 10, 128>}, {pipeline_mode = #tpu.pipeline_mode<synchronous>, transform_indices = @transform_5, window_bounds = array<i64: 128, 64>}, {pipeline_mode = #tpu.pipeline_mode<synchronous>, transform_indices = @transform_6, window_bounds = array<i64: 10, 64>}, {pipeline_mode = #tpu.pipeline_mode<synchronous>, transform_indices = @transform_7, window_bounds = array<i64: 64, 128>}, {pipeline_mode = #tpu.pipeline_mode<synchronous>, transform_indices = @transform_8, window_bounds = array<i64: 1, 128>}, {transform_indices = @transform_9, window_bounds = array<i64: 8, 128>}]} {
    %c0 = arith.constant 0 : index
    %c0_0 = arith.constant 0 : index
    %0 = vector.load %arg1[%c0, %c0_0] : memref<8x896xbf16, #tpu.memory_space<vmem>>, vector<8x896xbf16>
    %c0_1 = arith.constant 0 : index
    %c0_2 = arith.constant 0 : index
    %1 = vector.load %arg2[%c0_1, %c0_2] : memref<896x256xbf16, #tpu.memory_space<vmem>>, vector<896x256xbf16>
    %cst = arith.constant dense<0.000000e+00> : vector<8x256xf32>
    %2 = tpu.matmul %0, %1, %cst {dimension_numbers = #tpu.dot_dimension_numbers<[1], [0], [0], [1], [0, 0, 1, 1], [], []>} : vector<8x896xbf16>, vector<896x256xbf16>, vector<8x256xf32> -> vector<8x256xf32>
    %c0_3 = arith.constant 0 : index
    %c0_4 = arith.constant 0 : index
    %3 = vector.load %arg3[%c0_3, %c0_4] : memref<10x256xf32, #tpu.memory_space<vmem>>, vector<10x256xf32>
    %cst_5 = arith.constant 1.000000e+00 : f32
    %4 = vector.broadcast %cst_5 : f32 to vector<8x256xf32>
    %5 = arith.mulf %2, %4 : vector<8x256xf32>
    %6 = vector.extract_strided_slice %3 {offsets = [0, 0], sizes = [1, 256], strides = [1, 1]} : vector<10x256xf32> to vector<1x256xf32>
    %7 = vector.broadcast %6 : vector<1x256xf32> to vector<8x256xf32>
    %8 = arith.addf %5, %7 : vector<8x256xf32>
    %cst_6 = arith.constant 0.000000e+00 : f32
    %cst_7 = arith.constant 8.000000e+00 : f32
    %9 = vector.broadcast %cst_6 : f32 to vector<8x256xf32>
    %10 = arith.maximumf %9, %8 : vector<8x256xf32>
    %11 = vector.broadcast %cst_7 : f32 to vector<8x256xf32>
    %12 = arith.minimumf %11, %10 : vector<8x256xf32>
    %13 = arith.truncf %12 : vector<8x256xf32> to vector<8x256xbf16>
    %14 = vector.extract_strided_slice %3 {offsets = [1, 0], sizes = [9, 256], strides = [1, 1]} : vector<10x256xf32> to vector<9x256xf32>
    %15 = arith.truncf %14 : vector<9x256xf32> to vector<9x256xbf16>
    %16 = vector.extract_strided_slice %15 {offsets = [0, 0], sizes = [1, 256], strides = [1, 1]} : vector<9x256xbf16> to vector<1x256xbf16>
    %17 = vector.extract_strided_slice %15 {offsets = [1, 0], sizes = [1, 256], strides = [1, 1]} : vector<9x256xbf16> to vector<1x256xbf16>
    %18 = vector.broadcast %17 : vector<1x256xbf16> to vector<8x256xbf16>
    %19 = arith.mulf %18, %13 : vector<8x256xbf16>
    %20 = vector.broadcast %16 : vector<1x256xbf16> to vector<8x256xbf16>
    %21 = arith.addf %20, %19 : vector<8x256xbf16>
    %22 = vector.extract_strided_slice %15 {offsets = [2, 0], sizes = [1, 256], strides = [1, 1]} : vector<9x256xbf16> to vector<1x256xbf16>
    %cst_8 = arith.constant 1.000000e+00 : bf16
    %23 = vector.broadcast %cst_8 : bf16 to vector<8x256xbf16>
    %24 = arith.subf %13, %23 : vector<8x256xbf16>
    %cst_9 = arith.constant 0.000000e+00 : bf16
    %25 = vector.broadcast %cst_9 : bf16 to vector<8x256xbf16>
    %26 = arith.maximumf %24, %25 : vector<8x256xbf16>
    %27 = vector.broadcast %22 : vector<1x256xbf16> to vector<8x256xbf16>
    %28 = arith.mulf %27, %26 : vector<8x256xbf16>
    %29 = arith.addf %21, %28 : vector<8x256xbf16>
    %30 = vector.extract_strided_slice %15 {offsets = [3, 0], sizes = [1, 256], strides = [1, 1]} : vector<9x256xbf16> to vector<1x256xbf16>
    %cst_10 = arith.constant 2.000000e+00 : bf16
    %31 = vector.broadcast %cst_10 : bf16 to vector<8x256xbf16>
    %32 = arith.subf %13, %31 : vector<8x256xbf16>
    %cst_11 = arith.constant 0.000000e+00 : bf16
    %33 = vector.broadcast %cst_11 : bf16 to vector<8x256xbf16>
    %34 = arith.maximumf %32, %33 : vector<8x256xbf16>
    %35 = vector.broadcast %30 : vector<1x256xbf16> to vector<8x256xbf16>
    %36 = arith.mulf %35, %34 : vector<8x256xbf16>
    %37 = arith.addf %29, %36 : vector<8x256xbf16>
    %38 = vector.extract_strided_slice %15 {offsets = [4, 0], sizes = [1, 256], strides = [1, 1]} : vector<9x256xbf16> to vector<1x256xbf16>
    %cst_12 = arith.constant 3.000000e+00 : bf16
    %39 = vector.broadcast %cst_12 : bf16 to vector<8x256xbf16>
    %40 = arith.subf %13, %39 : vector<8x256xbf16>
    %cst_13 = arith.constant 0.000000e+00 : bf16
    %41 = vector.broadcast %cst_13 : bf16 to vector<8x256xbf16>
    %42 = arith.maximumf %40, %41 : vector<8x256xbf16>
    %43 = vector.broadcast %38 : vector<1x256xbf16> to vector<8x256xbf16>
    %44 = arith.mulf %43, %42 : vector<8x256xbf16>
    %45 = arith.addf %37, %44 : vector<8x256xbf16>
    %46 = vector.extract_strided_slice %15 {offsets = [5, 0], sizes = [1, 256], strides = [1, 1]} : vector<9x256xbf16> to vector<1x256xbf16>
    %cst_14 = arith.constant 4.000000e+00 : bf16
    %47 = vector.broadcast %cst_14 : bf16 to vector<8x256xbf16>
    %48 = arith.subf %13, %47 : vector<8x256xbf16>
    %cst_15 = arith.constant 0.000000e+00 : bf16
    %49 = vector.broadcast %cst_15 : bf16 to vector<8x256xbf16>
    %50 = arith.maximumf %48, %49 : vector<8x256xbf16>
    %51 = vector.broadcast %46 : vector<1x256xbf16> to vector<8x256xbf16>
    %52 = arith.mulf %51, %50 : vector<8x256xbf16>
    %53 = arith.addf %45, %52 : vector<8x256xbf16>
    %54 = vector.extract_strided_slice %15 {offsets = [6, 0], sizes = [1, 256], strides = [1, 1]} : vector<9x256xbf16> to vector<1x256xbf16>
    %cst_16 = arith.constant 5.000000e+00 : bf16
    %55 = vector.broadcast %cst_16 : bf16 to vector<8x256xbf16>
    %56 = arith.subf %13, %55 : vector<8x256xbf16>
    %cst_17 = arith.constant 0.000000e+00 : bf16
    %57 = vector.broadcast %cst_17 : bf16 to vector<8x256xbf16>
    %58 = arith.maximumf %56, %57 : vector<8x256xbf16>
    %59 = vector.broadcast %54 : vector<1x256xbf16> to vector<8x256xbf16>
    %60 = arith.mulf %59, %58 : vector<8x256xbf16>
    %61 = arith.addf %53, %60 : vector<8x256xbf16>
    %62 = vector.extract_strided_slice %15 {offsets = [7, 0], sizes = [1, 256], strides = [1, 1]} : vector<9x256xbf16> to vector<1x256xbf16>
    %cst_18 = arith.constant 6.000000e+00 : bf16
    %63 = vector.broadcast %cst_18 : bf16 to vector<8x256xbf16>
    %64 = arith.subf %13, %63 : vector<8x256xbf16>
    %cst_19 = arith.constant 0.000000e+00 : bf16
    %65 = vector.broadcast %cst_19 : bf16 to vector<8x256xbf16>
    %66 = arith.maximumf %64, %65 : vector<8x256xbf16>
    %67 = vector.broadcast %62 : vector<1x256xbf16> to vector<8x256xbf16>
    %68 = arith.mulf %67, %66 : vector<8x256xbf16>
    %69 = arith.addf %61, %68 : vector<8x256xbf16>
    %70 = vector.extract_strided_slice %15 {offsets = [8, 0], sizes = [1, 256], strides = [1, 1]} : vector<9x256xbf16> to vector<1x256xbf16>
    %cst_20 = arith.constant 7.000000e+00 : bf16
    %71 = vector.broadcast %cst_20 : bf16 to vector<8x256xbf16>
    %72 = arith.subf %13, %71 : vector<8x256xbf16>
    %cst_21 = arith.constant 0.000000e+00 : bf16
    %73 = vector.broadcast %cst_21 : bf16 to vector<8x256xbf16>
    %74 = arith.maximumf %72, %73 : vector<8x256xbf16>
    %75 = vector.broadcast %70 : vector<1x256xbf16> to vector<8x256xbf16>
    %76 = arith.mulf %75, %74 : vector<8x256xbf16>
    %77 = arith.addf %69, %76 : vector<8x256xbf16>
    %c0_22 = arith.constant 0 : index
    %c0_23 = arith.constant 0 : index
    %78 = vector.load %arg4[%c0_22, %c0_23] : memref<256x128xbf16, #tpu.memory_space<vmem>>, vector<256x128xbf16>
    %cst_24 = arith.constant dense<0.000000e+00> : vector<8x128xf32>
    %79 = tpu.matmul %77, %78, %cst_24 {dimension_numbers = #tpu.dot_dimension_numbers<[1], [0], [0], [1], [0, 0, 1, 1], [], []>} : vector<8x256xbf16>, vector<256x128xbf16>, vector<8x128xf32> -> vector<8x128xf32>
    %c0_25 = arith.constant 0 : index
    %c0_26 = arith.constant 0 : index
    %80 = vector.load %arg5[%c0_25, %c0_26] : memref<10x128xf32, #tpu.memory_space<vmem>>, vector<10x128xf32>
    %cst_27 = arith.constant 1.000000e+00 : f32
    %81 = vector.broadcast %cst_27 : f32 to vector<8x128xf32>
    %82 = arith.mulf %79, %81 : vector<8x128xf32>
    %83 = vector.extract_strided_slice %80 {offsets = [0, 0], sizes = [1, 128], strides = [1, 1]} : vector<10x128xf32> to vector<1x128xf32>
    %84 = vector.broadcast %83 : vector<1x128xf32> to vector<8x128xf32>
    %85 = arith.addf %82, %84 : vector<8x128xf32>
    %cst_28 = arith.constant 0.000000e+00 : f32
    %cst_29 = arith.constant 8.000000e+00 : f32
    %86 = vector.broadcast %cst_28 : f32 to vector<8x128xf32>
    %87 = arith.maximumf %86, %85 : vector<8x128xf32>
    %88 = vector.broadcast %cst_29 : f32 to vector<8x128xf32>
    %89 = arith.minimumf %88, %87 : vector<8x128xf32>
    %90 = arith.truncf %89 : vector<8x128xf32> to vector<8x128xbf16>
    %91 = vector.extract_strided_slice %80 {offsets = [1, 0], sizes = [9, 128], strides = [1, 1]} : vector<10x128xf32> to vector<9x128xf32>
    %92 = arith.truncf %91 : vector<9x128xf32> to vector<9x128xbf16>
    %93 = vector.extract_strided_slice %92 {offsets = [0, 0], sizes = [1, 128], strides = [1, 1]} : vector<9x128xbf16> to vector<1x128xbf16>
    %94 = vector.extract_strided_slice %92 {offsets = [1, 0], sizes = [1, 128], strides = [1, 1]} : vector<9x128xbf16> to vector<1x128xbf16>
    %95 = vector.broadcast %94 : vector<1x128xbf16> to vector<8x128xbf16>
    %96 = arith.mulf %95, %90 : vector<8x128xbf16>
    %97 = vector.broadcast %93 : vector<1x128xbf16> to vector<8x128xbf16>
    %98 = arith.addf %97, %96 : vector<8x128xbf16>
    %99 = vector.extract_strided_slice %92 {offsets = [2, 0], sizes = [1, 128], strides = [1, 1]} : vector<9x128xbf16> to vector<1x128xbf16>
    %cst_30 = arith.constant 1.000000e+00 : bf16
    %100 = vector.broadcast %cst_30 : bf16 to vector<8x128xbf16>
    %101 = arith.subf %90, %100 : vector<8x128xbf16>
    %cst_31 = arith.constant 0.000000e+00 : bf16
    %102 = vector.broadcast %cst_31 : bf16 to vector<8x128xbf16>
    %103 = arith.maximumf %101, %102 : vector<8x128xbf16>
    %104 = vector.broadcast %99 : vector<1x128xbf16> to vector<8x128xbf16>
    %105 = arith.mulf %104, %103 : vector<8x128xbf16>
    %106 = arith.addf %98, %105 : vector<8x128xbf16>
    %107 = vector.extract_strided_slice %92 {offsets = [3, 0], sizes = [1, 128], strides = [1, 1]} : vector<9x128xbf16> to vector<1x128xbf16>
    %cst_32 = arith.constant 2.000000e+00 : bf16
    %108 = vector.broadcast %cst_32 : bf16 to vector<8x128xbf16>
    %109 = arith.subf %90, %108 : vector<8x128xbf16>
    %cst_33 = arith.constant 0.000000e+00 : bf16
    %110 = vector.broadcast %cst_33 : bf16 to vector<8x128xbf16>
    %111 = arith.maximumf %109, %110 : vector<8x128xbf16>
    %112 = vector.broadcast %107 : vector<1x128xbf16> to vector<8x128xbf16>
    %113 = arith.mulf %112, %111 : vector<8x128xbf16>
    %114 = arith.addf %106, %113 : vector<8x128xbf16>
    %115 = vector.extract_strided_slice %92 {offsets = [4, 0], sizes = [1, 128], strides = [1, 1]} : vector<9x128xbf16> to vector<1x128xbf16>
    %cst_34 = arith.constant 3.000000e+00 : bf16
    %116 = vector.broadcast %cst_34 : bf16 to vector<8x128xbf16>
    %117 = arith.subf %90, %116 : vector<8x128xbf16>
    %cst_35 = arith.constant 0.000000e+00 : bf16
    %118 = vector.broadcast %cst_35 : bf16 to vector<8x128xbf16>
    %119 = arith.maximumf %117, %118 : vector<8x128xbf16>
    %120 = vector.broadcast %115 : vector<1x128xbf16> to vector<8x128xbf16>
    %121 = arith.mulf %120, %119 : vector<8x128xbf16>
    %122 = arith.addf %114, %121 : vector<8x128xbf16>
    %123 = vector.extract_strided_slice %92 {offsets = [5, 0], sizes = [1, 128], strides = [1, 1]} : vector<9x128xbf16> to vector<1x128xbf16>
    %cst_36 = arith.constant 4.000000e+00 : bf16
    %124 = vector.broadcast %cst_36 : bf16 to vector<8x128xbf16>
    %125 = arith.subf %90, %124 : vector<8x128xbf16>
    %cst_37 = arith.constant 0.000000e+00 : bf16
    %126 = vector.broadcast %cst_37 : bf16 to vector<8x128xbf16>
    %127 = arith.maximumf %125, %126 : vector<8x128xbf16>
    %128 = vector.broadcast %123 : vector<1x128xbf16> to vector<8x128xbf16>
    %129 = arith.mulf %128, %127 : vector<8x128xbf16>
    %130 = arith.addf %122, %129 : vector<8x128xbf16>
    %131 = vector.extract_strided_slice %92 {offsets = [6, 0], sizes = [1, 128], strides = [1, 1]} : vector<9x128xbf16> to vector<1x128xbf16>
    %cst_38 = arith.constant 5.000000e+00 : bf16
    %132 = vector.broadcast %cst_38 : bf16 to vector<8x128xbf16>
    %133 = arith.subf %90, %132 : vector<8x128xbf16>
    %cst_39 = arith.constant 0.000000e+00 : bf16
    %134 = vector.broadcast %cst_39 : bf16 to vector<8x128xbf16>
    %135 = arith.maximumf %133, %134 : vector<8x128xbf16>
    %136 = vector.broadcast %131 : vector<1x128xbf16> to vector<8x128xbf16>
    %137 = arith.mulf %136, %135 : vector<8x128xbf16>
    %138 = arith.addf %130, %137 : vector<8x128xbf16>
    %139 = vector.extract_strided_slice %92 {offsets = [7, 0], sizes = [1, 128], strides = [1, 1]} : vector<9x128xbf16> to vector<1x128xbf16>
    %cst_40 = arith.constant 6.000000e+00 : bf16
    %140 = vector.broadcast %cst_40 : bf16 to vector<8x128xbf16>
    %141 = arith.subf %90, %140 : vector<8x128xbf16>
    %cst_41 = arith.constant 0.000000e+00 : bf16
    %142 = vector.broadcast %cst_41 : bf16 to vector<8x128xbf16>
    %143 = arith.maximumf %141, %142 : vector<8x128xbf16>
    %144 = vector.broadcast %139 : vector<1x128xbf16> to vector<8x128xbf16>
    %145 = arith.mulf %144, %143 : vector<8x128xbf16>
    %146 = arith.addf %138, %145 : vector<8x128xbf16>
    %147 = vector.extract_strided_slice %92 {offsets = [8, 0], sizes = [1, 128], strides = [1, 1]} : vector<9x128xbf16> to vector<1x128xbf16>
    %cst_42 = arith.constant 7.000000e+00 : bf16
    %148 = vector.broadcast %cst_42 : bf16 to vector<8x128xbf16>
    %149 = arith.subf %90, %148 : vector<8x128xbf16>
    %cst_43 = arith.constant 0.000000e+00 : bf16
    %150 = vector.broadcast %cst_43 : bf16 to vector<8x128xbf16>
    %151 = arith.maximumf %149, %150 : vector<8x128xbf16>
    %152 = vector.broadcast %147 : vector<1x128xbf16> to vector<8x128xbf16>
    %153 = arith.mulf %152, %151 : vector<8x128xbf16>
    %154 = arith.addf %146, %153 : vector<8x128xbf16>
    %c0_44 = arith.constant 0 : index
    %c0_45 = arith.constant 0 : index
    %155 = vector.load %arg6[%c0_44, %c0_45] : memref<128x64xbf16, #tpu.memory_space<vmem>>, vector<128x64xbf16>
    %cst_46 = arith.constant dense<0.000000e+00> : vector<8x64xf32>
    %156 = tpu.matmul %154, %155, %cst_46 {dimension_numbers = #tpu.dot_dimension_numbers<[1], [0], [0], [1], [0, 0, 1, 1], [], []>} : vector<8x128xbf16>, vector<128x64xbf16>, vector<8x64xf32> -> vector<8x64xf32>
    %c0_47 = arith.constant 0 : index
    %c0_48 = arith.constant 0 : index
    %157 = vector.load %arg7[%c0_47, %c0_48] : memref<10x64xf32, #tpu.memory_space<vmem>>, vector<10x64xf32>
    %cst_49 = arith.constant 1.000000e+00 : f32
    %158 = vector.broadcast %cst_49 : f32 to vector<8x64xf32>
    %159 = arith.mulf %156, %158 : vector<8x64xf32>
    %160 = vector.extract_strided_slice %157 {offsets = [0, 0], sizes = [1, 64], strides = [1, 1]} : vector<10x64xf32> to vector<1x64xf32>
    %161 = vector.broadcast %160 : vector<1x64xf32> to vector<8x64xf32>
    %162 = arith.addf %159, %161 : vector<8x64xf32>
    %cst_50 = arith.constant 0.000000e+00 : f32
    %cst_51 = arith.constant 8.000000e+00 : f32
    %163 = vector.broadcast %cst_50 : f32 to vector<8x64xf32>
    %164 = arith.maximumf %163, %162 : vector<8x64xf32>
    %165 = vector.broadcast %cst_51 : f32 to vector<8x64xf32>
    %166 = arith.minimumf %165, %164 : vector<8x64xf32>
    %167 = arith.truncf %166 : vector<8x64xf32> to vector<8x64xbf16>
    %168 = vector.extract_strided_slice %157 {offsets = [1, 0], sizes = [9, 64], strides = [1, 1]} : vector<10x64xf32> to vector<9x64xf32>
    %169 = arith.truncf %168 : vector<9x64xf32> to vector<9x64xbf16>
    %170 = vector.extract_strided_slice %169 {offsets = [0, 0], sizes = [1, 64], strides = [1, 1]} : vector<9x64xbf16> to vector<1x64xbf16>
    %171 = vector.extract_strided_slice %169 {offsets = [1, 0], sizes = [1, 64], strides = [1, 1]} : vector<9x64xbf16> to vector<1x64xbf16>
    %172 = vector.broadcast %171 : vector<1x64xbf16> to vector<8x64xbf16>
    %173 = arith.mulf %172, %167 : vector<8x64xbf16>
    %174 = vector.broadcast %170 : vector<1x64xbf16> to vector<8x64xbf16>
    %175 = arith.addf %174, %173 : vector<8x64xbf16>
    %176 = vector.extract_strided_slice %169 {offsets = [2, 0], sizes = [1, 64], strides = [1, 1]} : vector<9x64xbf16> to vector<1x64xbf16>
    %cst_52 = arith.constant 1.000000e+00 : bf16
    %177 = vector.broadcast %cst_52 : bf16 to vector<8x64xbf16>
    %178 = arith.subf %167, %177 : vector<8x64xbf16>
    %cst_53 = arith.constant 0.000000e+00 : bf16
    %179 = vector.broadcast %cst_53 : bf16 to vector<8x64xbf16>
    %180 = arith.maximumf %178, %179 : vector<8x64xbf16>
    %181 = vector.broadcast %176 : vector<1x64xbf16> to vector<8x64xbf16>
    %182 = arith.mulf %181, %180 : vector<8x64xbf16>
    %183 = arith.addf %175, %182 : vector<8x64xbf16>
    %184 = vector.extract_strided_slice %169 {offsets = [3, 0], sizes = [1, 64], strides = [1, 1]} : vector<9x64xbf16> to vector<1x64xbf16>
    %cst_54 = arith.constant 2.000000e+00 : bf16
    %185 = vector.broadcast %cst_54 : bf16 to vector<8x64xbf16>
    %186 = arith.subf %167, %185 : vector<8x64xbf16>
    %cst_55 = arith.constant 0.000000e+00 : bf16
    %187 = vector.broadcast %cst_55 : bf16 to vector<8x64xbf16>
    %188 = arith.maximumf %186, %187 : vector<8x64xbf16>
    %189 = vector.broadcast %184 : vector<1x64xbf16> to vector<8x64xbf16>
    %190 = arith.mulf %189, %188 : vector<8x64xbf16>
    %191 = arith.addf %183, %190 : vector<8x64xbf16>
    %192 = vector.extract_strided_slice %169 {offsets = [4, 0], sizes = [1, 64], strides = [1, 1]} : vector<9x64xbf16> to vector<1x64xbf16>
    %cst_56 = arith.constant 3.000000e+00 : bf16
    %193 = vector.broadcast %cst_56 : bf16 to vector<8x64xbf16>
    %194 = arith.subf %167, %193 : vector<8x64xbf16>
    %cst_57 = arith.constant 0.000000e+00 : bf16
    %195 = vector.broadcast %cst_57 : bf16 to vector<8x64xbf16>
    %196 = arith.maximumf %194, %195 : vector<8x64xbf16>
    %197 = vector.broadcast %192 : vector<1x64xbf16> to vector<8x64xbf16>
    %198 = arith.mulf %197, %196 : vector<8x64xbf16>
    %199 = arith.addf %191, %198 : vector<8x64xbf16>
    %200 = vector.extract_strided_slice %169 {offsets = [5, 0], sizes = [1, 64], strides = [1, 1]} : vector<9x64xbf16> to vector<1x64xbf16>
    %cst_58 = arith.constant 4.000000e+00 : bf16
    %201 = vector.broadcast %cst_58 : bf16 to vector<8x64xbf16>
    %202 = arith.subf %167, %201 : vector<8x64xbf16>
    %cst_59 = arith.constant 0.000000e+00 : bf16
    %203 = vector.broadcast %cst_59 : bf16 to vector<8x64xbf16>
    %204 = arith.maximumf %202, %203 : vector<8x64xbf16>
    %205 = vector.broadcast %200 : vector<1x64xbf16> to vector<8x64xbf16>
    %206 = arith.mulf %205, %204 : vector<8x64xbf16>
    %207 = arith.addf %199, %206 : vector<8x64xbf16>
    %208 = vector.extract_strided_slice %169 {offsets = [6, 0], sizes = [1, 64], strides = [1, 1]} : vector<9x64xbf16> to vector<1x64xbf16>
    %cst_60 = arith.constant 5.000000e+00 : bf16
    %209 = vector.broadcast %cst_60 : bf16 to vector<8x64xbf16>
    %210 = arith.subf %167, %209 : vector<8x64xbf16>
    %cst_61 = arith.constant 0.000000e+00 : bf16
    %211 = vector.broadcast %cst_61 : bf16 to vector<8x64xbf16>
    %212 = arith.maximumf %210, %211 : vector<8x64xbf16>
    %213 = vector.broadcast %208 : vector<1x64xbf16> to vector<8x64xbf16>
    %214 = arith.mulf %213, %212 : vector<8x64xbf16>
    %215 = arith.addf %207, %214 : vector<8x64xbf16>
    %216 = vector.extract_strided_slice %169 {offsets = [7, 0], sizes = [1, 64], strides = [1, 1]} : vector<9x64xbf16> to vector<1x64xbf16>
    %cst_62 = arith.constant 6.000000e+00 : bf16
    %217 = vector.broadcast %cst_62 : bf16 to vector<8x64xbf16>
    %218 = arith.subf %167, %217 : vector<8x64xbf16>
    %cst_63 = arith.constant 0.000000e+00 : bf16
    %219 = vector.broadcast %cst_63 : bf16 to vector<8x64xbf16>
    %220 = arith.maximumf %218, %219 : vector<8x64xbf16>
    %221 = vector.broadcast %216 : vector<1x64xbf16> to vector<8x64xbf16>
    %222 = arith.mulf %221, %220 : vector<8x64xbf16>
    %223 = arith.addf %215, %222 : vector<8x64xbf16>
    %224 = vector.extract_strided_slice %169 {offsets = [8, 0], sizes = [1, 64], strides = [1, 1]} : vector<9x64xbf16> to vector<1x64xbf16>
    %cst_64 = arith.constant 7.000000e+00 : bf16
    %225 = vector.broadcast %cst_64 : bf16 to vector<8x64xbf16>
    %226 = arith.subf %167, %225 : vector<8x64xbf16>
    %cst_65 = arith.constant 0.000000e+00 : bf16
    %227 = vector.broadcast %cst_65 : bf16 to vector<8x64xbf16>
    %228 = arith.maximumf %226, %227 : vector<8x64xbf16>
    %229 = vector.broadcast %224 : vector<1x64xbf16> to vector<8x64xbf16>
    %230 = arith.mulf %229, %228 : vector<8x64xbf16>
    %231 = arith.addf %223, %230 : vector<8x64xbf16>
    %c0_66 = arith.constant 0 : index
    %c0_67 = arith.constant 0 : index
    %232 = vector.load %arg8[%c0_66, %c0_67] : memref<64x128xbf16, #tpu.memory_space<vmem>>, vector<64x128xbf16>
    %cst_68 = arith.constant dense<0.000000e+00> : vector<8x128xf32>
    %233 = tpu.matmul %231, %232, %cst_68 {dimension_numbers = #tpu.dot_dimension_numbers<[1], [0], [0], [1], [0, 0, 1, 1], [], []>} : vector<8x64xbf16>, vector<64x128xbf16>, vector<8x128xf32> -> vector<8x128xf32>
    %c0_69 = arith.constant 0 : index
    %c0_70 = arith.constant 0 : index
    %234 = vector.load %arg9[%c0_69, %c0_70] : memref<1x128xf32, #tpu.memory_space<vmem>>, vector<1x128xf32>
    %235 = vector.broadcast %234 : vector<1x128xf32> to vector<8x128xf32>
    %236 = arith.addf %233, %235 : vector<8x128xf32>
    %cst_71 = arith.constant dense<0xFF800000> : vector<8xf32>
    %237 = vector.multi_reduction <maximumf>, %236, %cst_71 [1] : vector<8x128xf32> to vector<8xf32>
    %238 = vector.shape_cast %237 : vector<8xf32> to vector<8x1xf32>
    %239 = vector.broadcast %238 : vector<8x1xf32> to vector<8x128xf32>
    %240 = arith.subf %236, %239 : vector<8x128xf32>
    %241 = math.exp %240 : vector<8x128xf32>
    %cst_72 = arith.constant dense<0.000000e+00> : vector<8xf32>
    %242 = vector.multi_reduction <add>, %241, %cst_72 [1] : vector<8x128xf32> to vector<8xf32>
    %243 = vector.shape_cast %242 : vector<8xf32> to vector<8x1xf32>
    %244 = math.log %243 : vector<8x1xf32>
    %245 = vector.broadcast %244 : vector<8x1xf32> to vector<8x128xf32>
    %246 = arith.subf %240, %245 : vector<8x128xf32>
    %247 = arith.truncf %246 : vector<8x128xf32> to vector<8x128xbf16>
    %c0_73 = arith.constant 0 : index
    %c0_74 = arith.constant 0 : index
    %248 = vector.load %arg10[%c0_73, %c0_74] : memref<8x128xbf16, #tpu.memory_space<vmem>>, vector<8x128xbf16>
    tpu.vector_store %arg10[%c0_73, %c0_74], %247 {strides = array<i32>} : memref<8x128xbf16, #tpu.memory_space<vmem>>, vector<8x128xbf16>,
    return
  }
  func.func @transform_0(%arg0: i32) -> (i32, i32) {
    %c0_i32 = arith.constant 0 : i32
    %c0_i32_0 = arith.constant 0 : i32
    return %arg0, %c0_i32 : i32, i32
  }
  func.func @transform_1(%arg0: i32) -> (i32, i32) {
    %c0_i32 = arith.constant 0 : i32
    %c0_i32_0 = arith.constant 0 : i32
    %c0_i32_1 = arith.constant 0 : i32
    return %c0_i32, %c0_i32_0 : i32, i32
  }
  func.func @transform_2(%arg0: i32) -> (i32, i32) {
    %c0_i32 = arith.constant 0 : i32
    %c0_i32_0 = arith.constant 0 : i32
    %c0_i32_1 = arith.constant 0 : i32
    return %c0_i32, %c0_i32_0 : i32, i32
  }
  func.func @transform_3(%arg0: i32) -> (i32, i32) {
    %c0_i32 = arith.constant 0 : i32
    %c0_i32_0 = arith.constant 0 : i32
    %c0_i32_1 = arith.constant 0 : i32
    return %c0_i32, %c0_i32_0 : i32, i32
  }
  func.func @transform_4(%arg0: i32) -> (i32, i32) {
    %c0_i32 = arith.constant 0 : i32
    %c0_i32_0 = arith.constant 0 : i32
    %c0_i32_1 = arith.constant 0 : i32
    return %c0_i32, %c0_i32_0 : i32, i32
  }
  func.func @transform_5(%arg0: i32) -> (i32, i32) {
    %c0_i32 = arith.constant 0 : i32
    %c0_i32_0 = arith.constant 0 : i32
    %c0_i32_1 = arith.constant 0 : i32
    return %c0_i32, %c0_i32_0 : i32, i32
  }
  func.func @transform_6(%arg0: i32) -> (i32, i32) {
    %c0_i32 = arith.constant 0 : i32
    %c0_i32_0 = arith.constant 0 : i32
    %c0_i32_1 = arith.constant 0 : i32
    return %c0_i32, %c0_i32_0 : i32, i32
  }
  func.func @transform_7(%arg0: i32) -> (i32, i32) {
    %c0_i32 = arith.constant 0 : i32
    %c0_i32_0 = arith.constant 0 : i32
    %c0_i32_1 = arith.constant 0 : i32
    return %c0_i32, %c0_i32_0 : i32, i32
  }
  func.func @transform_8(%arg0: i32) -> (i32, i32) {
    %c0_i32 = arith.constant 0 : i32
    %c0_i32_0 = arith.constant 0 : i32
    %c0_i32_1 = arith.constant 0 : i32
    return %c0_i32, %c0_i32_0 : i32, i32
  }
  func.func @transform_9(%arg0: i32) -> (i32, i32) {
    %c0_i32 = arith.constant 0 : i32
    %c0_i32_0 = arith.constant 0 : i32
    return %arg0, %c0_i32 : i32, i32
  }
}

</mosaic_0001>

<llo_original>
// kernel: tpu_custom_call.1
$region0: #{tpu_custom_call.1}
  #allocation0 [shape = 'u32[]', space=smem, size = 0x4, offset = 0x4, fixed_abs, tag = 'smem constant byte address 0x4 - core index']
  #allocation1 [shape = 'u32[144,128]{1,0:T(1,128)}', space=vmem, size = 0x12000, scoped, tag = 'internal scratch']
  %s0 = inlined_call_operand.vmem [shape: bf16[8,896], index: 0, kind: input, shape index: {}]
  %s1 = inlined_call_operand.hbm [shape: bf16[896,256], index: 1, kind: input, shape index: {}]
  %s2 = inlined_call_operand.vmem [shape: f32[10,256], index: 2, kind: input, shape index: {}]
  %s3 = inlined_call_operand.hbm [shape: bf16[256,128], index: 3, kind: input, shape index: {}]
  %s4 = inlined_call_operand.vmem [shape: f32[10,128], index: 4, kind: input, shape index: {}]
  %s5 = inlined_call_operand.vmem [shape: bf16[128,64], index: 5, kind: input, shape index: {}]
  %s6 = inlined_call_operand.hbm [shape: f32[10,64], index: 6, kind: input, shape index: {}]
  %s7 = inlined_call_operand.vmem [shape: bf16[64,128], index: 7, kind: input, shape index: {}]
  %s8 = inlined_call_operand.vmem [shape: f32[1,128], index: 8, kind: input, shape index: {}]
  %s9 = inlined_call_operand.hbm [shape: bf16[8,128], index: 9, kind: output, shape index: {}]
  %s10 = sld [smem:[#allocation0]]
  $region58: #{tpu_custom_call.1} parent=0
    _
  %s12 = ssub.s32 1, %s10
  %s13 = scalar_select 0, %s12, %s10
  $region1: #{tpu_custom_call.1} parent=0
    #allocation2 [shape = 'u8[458752]{0}', space=vmem, size = 0x70000, scoped, tag = 'input window, operand 1, single buffered']
    #allocation3 [shape = 's32[1]{0}', space=sflag, size = 0x4, scoped, tag = 'scoped memory for tpu_custom_call.1']
    #allocation4 [shape = 's32[1]{0}', space=sflag, size = 0x4, scoped, tag = 'scoped memory for tpu_custom_call.1']
    #allocation5 [shape = 'u8[65536]{0}', space=vmem, size = 0x10000, scoped, tag = 'input window, operand 3, single buffered']
    #allocation6 [shape = 's32[1]{0}', space=sflag, size = 0x4, scoped, tag = 'scoped memory for tpu_custom_call.1']
    #allocation7 [shape = 'u8[8192]{0}', space=vmem, size = 0x2000, scoped, tag = 'input window, operand 6, single buffered']
    #allocation8 [shape = 'u8[2048]{0}', space=vmem, size = 0x800, scoped, tag = 'output window, operand 0, single buffered']
    %14 = vsyncpa [#allocation3], 0
    %15 = vsyncpa [#allocation6], 0
    %16 = vsyncpa [#allocation4], 0
    // Predicated region
    $region2: #{tpu_custom_call.1} parent=1 // pred_check
      _
    $region3: #{tpu_custom_call.1} parent=1 // pred_check_branch
      %18 = sbr.rel (0) target = $region5
    $region4: #{tpu_custom_call.1} parent=1 // pred_region
      _
    $region5: #{tpu_custom_call.1} parent=1 // pred_fallthru
      _
    // Predicated region
    $region6: #{tpu_custom_call.1} parent=1 // pred_check
      _
    $region7: #{tpu_custom_call.1} parent=1 // pred_check_branch
      %20 = sbr.rel (0) target = $region9
    $region8: #{tpu_custom_call.1} parent=1 // pred_region
      %s22 = ssub.s32 14336, 14336
      %23 = vsyncadd [#allocation3], %s22
      %s24 = sshll.u32 [#allocation2], 4
      %s25 = int_to_ptr.vmem [resolvable:$true] %s24
      %30 = dma.hbm_to_vmem [thread:$0]  %s1, 14336, %s25, [#allocation3], 128, 128, 8
    $region9: #{tpu_custom_call.1} parent=1 // pred_fallthru
      _
    // Predicated region
    $region10: #{tpu_custom_call.1} parent=1 // pred_check
      _
    $region11: #{tpu_custom_call.1} parent=1 // pred_check_branch
      %32 = sbr.rel (0) target = $region13
    $region12: #{tpu_custom_call.1} parent=1 // pred_region
      _
    $region13: #{tpu_custom_call.1} parent=1 // pred_fallthru
      _
    // Predicated region
    $region14: #{tpu_custom_call.1} parent=1 // pred_check
      _
    $region15: #{tpu_custom_call.1} parent=1 // pred_check_branch
      %34 = sbr.rel (0) target = $region17
    $region16: #{tpu_custom_call.1} parent=1 // pred_region
      %s36 = ssub.s32 2048, 2048
      %37 = vsyncadd [#allocation6], %s36
      %s38 = sshll.u32 [#allocation5], 4
      %s39 = int_to_ptr.vmem [resolvable:$true] %s38
      %44 = dma.hbm_to_vmem [thread:$0]  %s3, 2048, %s39, [#allocation6], 64, 64, 4
    $region17: #{tpu_custom_call.1} parent=1 // pred_fallthru
      _
    // Predicated region
    $region18: #{tpu_custom_call.1} parent=1 // pred_check
      _
    $region19: #{tpu_custom_call.1} parent=1 // pred_check_branch
      %46 = sbr.rel (0) target = $region21
    $region20: #{tpu_custom_call.1} parent=1 // pred_region
      _
    $region21: #{tpu_custom_call.1} parent=1 // pred_fallthru
      _
    // Predicated region
    $region22: #{tpu_custom_call.1} parent=1 // pred_check
      _
    $region23: #{tpu_custom_call.1} parent=1 // pred_check_branch
      %48 = sbr.rel (0) target = $region25
    $region24: #{tpu_custom_call.1} parent=1 // pred_region
      _
    $region25: #{tpu_custom_call.1} parent=1 // pred_fallthru
      _
    // Predicated region
    $region26: #{tpu_custom_call.1} parent=1 // pred_check
      _
    $region27: #{tpu_custom_call.1} parent=1 // pred_check_branch
      %50 = sbr.rel (0) target = $region29
    $region28: #{tpu_custom_call.1} parent=1 // pred_region
      %s52 = ssub.s32 256, 256
      %53 = vsyncadd [#allocation6], %s52
      %s54 = sshll.u32 [#allocation7], 4
      %s55 = int_to_ptr.vmem [resolvable:$true] %s54
      %60 = dma.hbm_to_vmem [thread:$0]  %s6, 256, %s55, [#allocation6], 128, 128, 8
    $region29: #{tpu_custom_call.1} parent=1 // pred_fallthru
      _
    // Predicated region
    $region30: #{tpu_custom_call.1} parent=1 // pred_check
      _
    $region31: #{tpu_custom_call.1} parent=1 // pred_check_branch
      %62 = sbr.rel (0) target = $region33
    $region32: #{tpu_custom_call.1} parent=1 // pred_region
      _
    $region33: #{tpu_custom_call.1} parent=1 // pred_fallthru
      _
    // Predicated region
    $region34: #{tpu_custom_call.1} parent=1 // pred_check
      _
    $region35: #{tpu_custom_call.1} parent=1 // pred_check_branch
      %64 = sbr.rel (0) target = $region37
    $region36: #{tpu_custom_call.1} parent=1 // pred_region
      _
    $region37: #{tpu_custom_call.1} parent=1 // pred_fallthru
      _
    // Predicated region
    $region38: #{tpu_custom_call.1} parent=1 // pred_check
      _
    $region39: #{tpu_custom_call.1} parent=1 // pred_check_branch
      %66 = sbr.rel (0) target = $region41
    $region40: #{tpu_custom_call.1} parent=1 // pred_region
      %67 = dma.done [#allocation3], 14336
    $region41: #{tpu_custom_call.1} parent=1 // pred_fallthru
      _
    // Predicated region
    $region42: #{tpu_custom_call.1} parent=1 // pred_check
      _
    $region43: #{tpu_custom_call.1} parent=1 // pred_check_branch
      %69 = sbr.rel (0) target = $region45
    $region44: #{tpu_custom_call.1} parent=1 // pred_region
      %70 = dma.done [#allocation6], 2048
    $region45: #{tpu_custom_call.1} parent=1 // pred_fallthru
      _
    // Predicated region
    $region46: #{tpu_custom_call.1} parent=1 // pred_check
      _
    $region47: #{tpu_custom_call.1} parent=1 // pred_check_branch
      %72 = sbr.rel (0) target = $region49
    $region48: #{tpu_custom_call.1} parent=1 // pred_region
      %73 = dma.done [#allocation6], 256
    $region49: #{tpu_custom_call.1} parent=1 // pred_fallthru
      _
    %v82 = vld [vmem:[%s0] sm:$0xff]
    %v83 = vld [vmem:[%s0 + $0x8] sm:$0xff]
    %v84 = vld [vmem:[%s0 + $0x10] sm:$0xff]
    %v85 = vld [vmem:[%s0 + $0x18] sm:$0xf]
    %v86 = vld [vmem:[#allocation2] sm:$0xff]
    %v87 = vld [vmem:[#allocation2 + $0x8] sm:$0xff]
    %v88 = vld [vmem:[#allocation2 + $0x10] sm:$0xff]
    %v89 = vld [vmem:[#allocation2 + $0x18] sm:$0xff]
    %v90 = vld [vmem:[#allocation2 + $0x20] sm:$0xff]
    %v91 = vld [vmem:[#allocation2 + $0x28] sm:$0xff]
    %v92 = vld [vmem:[#allocation2 + $0x30] sm:$0xff]
    %v93 = vld [vmem:[#allocation2 + $0x38] sm:$0xff]
    %v94 = vld [vmem:[#allocation2 + $0x40] sm:$0xff]
    %v95 = vld [vmem:[#allocation2 + $0x48] sm:$0xff]
    %v96 = vld [vmem:[#allocation2 + $0x50] sm:$0xff]
    %v97 = vld [vmem:[#allocation2 + $0x58] sm:$0xff]
    %v98 = vld [vmem:[#allocation2 + $0x60] sm:$0xff]
    %v99 = vld [vmem:[#allocation2 + $0x68] sm:$0xff]
    %v100 = vld [vmem:[#allocation2 + $0x70] sm:$0xff]
    %v101 = vld [vmem:[#allocation2 + $0x78] sm:$0xff]
    %v102 = vld [vmem:[#allocation2 + $0x80] sm:$0xff]
    %v103 = vld [vmem:[#allocation2 + $0x88] sm:$0xff]
    %v104 = vld [vmem:[#allocation2 + $0x90] sm:$0xff]
    %v105 = vld [vmem:[#allocation2 + $0x98] sm:$0xff]
    %v106 = vld [vmem:[#allocation2 + $0xa0] sm:$0xff]
    %v107 = vld [vmem:[#allocation2 + $0xa8] sm:$0xff]
    %v108 = vld [vmem:[#allocation2 + $0xb0] sm:$0xff]
    %v109 = vld [vmem:[#allocation2 + $0xb8] sm:$0xff]
    %v110 = vld [vmem:[#allocation2 + $0xc0] sm:$0xff]
    %v111 = vld [vmem:[#allocation2 + $0xc8] sm:$0xff]
    %v112 = vld [vmem:[#allocation2 + $0xd0] sm:$0xff]
    %v113 = vld [vmem:[#allocation2 + $0xd8] sm:$0xff]
    %v114 = vld [vmem:[#allocation2 + $0xe0] sm:$0xff]
    %v115 = vld [vmem:[#allocation2 + $0xe8] sm:$0xff]
    %v116 = vld [vmem:[#allocation2 + $0xf0] sm:$0xff]
    %v117 = vld [vmem:[#allocation2 + $0xf8] sm:$0xff]
    %v118 = vld [vmem:[#allocation2 + $0x100] sm:$0xff]
    %v119 = vld [vmem:[#allocation2 + $0x108] sm:$0xff]
    %v120 = vld [vmem:[#allocation2 + $0x110] sm:$0xff]
    %v121 = vld [vmem:[#allocation2 + $0x118] sm:$0xff]
    %v122 = vld [vmem:[#allocation2 + $0x120] sm:$0xff]
    %v123 = vld [vmem:[#allocation2 + $0x128] sm:$0xff]
    %v124 = vld [vmem:[#allocation2 + $0x130] sm:$0xff]
    %v125 = vld [vmem:[#allocation2 + $0x138] sm:$0xff]
    %v126 = vld [vmem:[#allocation2 + $0x140] sm:$0xff]
    %v127 = vld [vmem:[#allocation2 + $0x148] sm:$0xff]
    %v128 = vld [vmem:[#allocation2 + $0x150] sm:$0xff]
    %v129 = vld [vmem:[#allocation2 + $0x158] sm:$0xff]
    %v130 = vld [vmem:[#allocation2 + $0x160] sm:$0xff]
    %v131 = vld [vmem:[#allocation2 + $0x168] sm:$0xff]
    %v132 = vld [vmem:[#allocation2 + $0x170] sm:$0xff]
    %v133 = vld [vmem:[#allocation2 + $0x178] sm:$0xff]
    %v134 = vld [vmem:[#allocation2 + $0x180] sm:$0xff]
    %v135 = vld [vmem:[#allocation2 + $0x188] sm:$0xff]
    %v136 = vld [vmem:[#allocation2 + $0x190] sm:$0xff]
    %v137 = vld [vmem:[#allocation2 + $0x198] sm:$0xff]
    %v138 = vld [vmem:[#allocation2 + $0x1a0] sm:$0xff]
    %v139 = vld [vmem:[#allocation2 + $0x1a8] sm:$0xff]
    %v140 = vld [vmem:[#allocation2 + $0x1b0] sm:$0xff]
    %v141 = vld [vmem:[#allocation2 + $0x1b8] sm:$0xff]
    %v142 = vld [vmem:[#allocation2 + $0x1c0] sm:$0xff]
    %v143 = vld [vmem:[#allocation2 + $0x1c8] sm:$0xff]
    %v144 = vld [vmem:[#allocation2 + $0x1d0] sm:$0xff]
    %v145 = vld [vmem:[#allocation2 + $0x1d8] sm:$0xff]
    %v146 = vld [vmem:[#allocation2 + $0x1e0] sm:$0xff]
    %v147 = vld [vmem:[#allocation2 + $0x1e8] sm:$0xff]
    %v148 = vld [vmem:[#allocation2 + $0x1f0] sm:$0xff]
    %v149 = vld [vmem:[#allocation2 + $0x1f8] sm:$0xff]
    %v150 = vld [vmem:[#allocation2 + $0x200] sm:$0xff]
    %v151 = vld [vmem:[#allocation2 + $0x208] sm:$0xff]
    %v152 = vld [vmem:[#allocation2 + $0x210] sm:$0xff]
    %v153 = vld [vmem:[#allocation2 + $0x218] sm:$0xff]
    %v154 = vld [vmem:[#allocation2 + $0x220] sm:$0xff]
    %v155 = vld [vmem:[#allocation2 + $0x228] sm:$0xff]
    %v156 = vld [vmem:[#allocation2 + $0x230] sm:$0xff]
    %v157 = vld [vmem:[#allocation2 + $0x238] sm:$0xff]
    %v158 = vld [vmem:[#allocation2 + $0x240] sm:$0xff]
    %v159 = vld [vmem:[#allocation2 + $0x248] sm:$0xff]
    %v160 = vld [vmem:[#allocation2 + $0x250] sm:$0xff]
    %v161 = vld [vmem:[#allocation2 + $0x258] sm:$0xff]
    %v162 = vld [vmem:[#allocation2 + $0x260] sm:$0xff]
    %v163 = vld [vmem:[#allocation2 + $0x268] sm:$0xff]
    %v164 = vld [vmem:[#allocation2 + $0x270] sm:$0xff]
    %v165 = vld [vmem:[#allocation2 + $0x278] sm:$0xff]
    %v166 = vld [vmem:[#allocation2 + $0x280] sm:$0xff]
    %v167 = vld [vmem:[#allocation2 + $0x288] sm:$0xff]
    %v168 = vld [vmem:[#allocation2 + $0x290] sm:$0xff]
    %v169 = vld [vmem:[#allocation2 + $0x298] sm:$0xff]
    %v170 = vld [vmem:[#allocation2 + $0x2a0] sm:$0xff]
    %v171 = vld [vmem:[#allocation2 + $0x2a8] sm:$0xff]
    %v172 = vld [vmem:[#allocation2 + $0x2b0] sm:$0xff]
    %v173 = vld [vmem:[#allocation2 + $0x2b8] sm:$0xff]
    %v174 = vld [vmem:[#allocation2 + $0x2c0] sm:$0xff]
    %v175 = vld [vmem:[#allocation2 + $0x2c8] sm:$0xff]
    %v176 = vld [vmem:[#allocation2 + $0x2d0] sm:$0xff]
    %v177 = vld [vmem:[#allocation2 + $0x2d8] sm:$0xff]
    %v178 = vld [vmem:[#allocation2 + $0x2e0] sm:$0xff]
    %v179 = vld [vmem:[#allocation2 + $0x2e8] sm:$0xff]
    %v180 = vld [vmem:[#allocation2 + $0x2f0] sm:$0xff]
    %v181 = vld [vmem:[#allocation2 + $0x2f8] sm:$0xff]
    %v182 = vld [vmem:[#allocation2 + $0x300] sm:$0xff]
    %v183 = vld [vmem:[#allocation2 + $0x308] sm:$0xff]
    %v184 = vld [vmem:[#allocation2 + $0x310] sm:$0xff]
    %v185 = vld [vmem:[#allocation2 + $0x318] sm:$0xff]
    %v186 = vld [vmem:[#allocation2 + $0x320] sm:$0xff]
    %v187 = vld [vmem:[#allocation2 + $0x328] sm:$0xff]
    %v188 = vld [vmem:[#allocation2 + $0x330] sm:$0xff]
    %v189 = vld [vmem:[#allocation2 + $0x338] sm:$0xff]
    %v190 = vld [vmem:[#allocation2 + $0x340] sm:$0xff]
    %v191 = vld [vmem:[#allocation2 + $0x348] sm:$0xff]
    %v192 = vld [vmem:[#allocation2 + $0x350] sm:$0xff]
    %v193 = vld [vmem:[#allocation2 + $0x358] sm:$0xff]
    %v194 = vld [vmem:[#allocation2 + $0x360] sm:$0xff]
    %v195 = vld [vmem:[#allocation2 + $0x368] sm:$0xff]
    %v196 = vld [vmem:[#allocation2 + $0x370] sm:$0xff]
    %v197 = vld [vmem:[#allocation2 + $0x378] sm:$0xff]
    %v198 = vld [vmem:[%s2] sm:$0xff]
    %v199 = vld [vmem:[%s2 + $0x8] sm:$0xff]
    %v200 = vld [vmem:[%s2 + $0x10] sm:$0x3]
    %v201 = vld [vmem:[%s2 + $0x18] sm:$0x3]
    %v202 = vlaneseq
    %v203 = vshrl.u32 %v202, 7
    %v204 = vsub.s32 0, %v203
    %v205 = vrot.slane %v198, %v204
    %v206 = vlaneseq
    %v207 = vshrl.u32 %v206, 7
    %v208 = vsub.s32 0, %v207
    %v209 = vrot.slane %v199, %v208
    %v214 = vunpack.c.l.b16 %v82
    %v215 = vunpack.c.h.b16 %v82
    %v216 = vunpack.c.l.b16 %v83
    %v217 = vunpack.c.h.b16 %v83
    %v218 = vunpack.c.l.b16 %v84
    %v219 = vunpack.c.h.b16 %v84
    %v220 = vunpack.c.l.b16 %v85
    %v221 = vpack.c.b16 %v214, %v214
    %v222 = vpack.c.b16 %v215, %v215
    %v223 = vpack.c.b16 %v216, %v216
    %v224 = vpack.c.b16 %v217, %v217
    %v225 = vpack.c.b16 %v218, %v218
    %v226 = vpack.c.b16 %v219, %v219
    %v227 = vpack.c.b16 %v220, %v220
    %v347 = vunpack.c.l.b16 %v86
    %v348 = vunpack.c.h.b16 %v86
    %v349 = vunpack.c.l.b16 %v87
    %v350 = vunpack.c.h.b16 %v87
    %v351 = vunpack.c.l.b16 %v88
    %v352 = vunpack.c.h.b16 %v88
    %v353 = vunpack.c.l.b16 %v89
    %v354 = vunpack.c.h.b16 %v89
    %v355 = vunpack.c.l.b16 %v90
    %v356 = vunpack.c.h.b16 %v90
    %v357 = vunpack.c.l.b16 %v91
    %v358 = vunpack.c.h.b16 %v91
    %v359 = vunpack.c.l.b16 %v92
    %v360 = vunpack.c.h.b16 %v92
    %v361 = vunpack.c.l.b16 %v93
    %v362 = vunpack.c.h.b16 %v93
    %v363 = vunpack.c.l.b16 %v94
    %v364 = vunpack.c.h.b16 %v94
    %v365 = vunpack.c.l.b16 %v95
    %v366 = vunpack.c.h.b16 %v95
    %v367 = vunpack.c.l.b16 %v96
    %v368 = vunpack.c.h.b16 %v96
    %v369 = vunpack.c.l.b16 %v97
    %v370 = vunpack.c.h.b16 %v97
    %v371 = vunpack.c.l.b16 %v98
    %v372 = vunpack.c.h.b16 %v98
    %v373 = vunpack.c.l.b16 %v99
    %v374 = vunpack.c.h.b16 %v99
    %v375 = vunpack.c.l.b16 %v100
    %v376 = vunpack.c.h.b16 %v100
    %v377 = vunpack.c.l.b16 %v101
    %v378 = vunpack.c.h.b16 %v101
    %v379 = vunpack.c.l.b16 %v102
    %v380 = vunpack.c.h.b16 %v102
    %v381 = vunpack.c.l.b16 %v103
    %v382 = vunpack.c.h.b16 %v103
    %v383 = vunpack.c.l.b16 %v104
    %v384 = vunpack.c.h.b16 %v104
    %v385 = vunpack.c.l.b16 %v105
    %v386 = vunpack.c.h.b16 %v105
    %v387 = vunpack.c.l.b16 %v106
    %v388 = vunpack.c.h.b16 %v106
    %v389 = vunpack.c.l.b16 %v107
    %v390 = vunpack.c.h.b16 %v107
    %v391 = vunpack.c.l.b16 %v108
    %v392 = vunpack.c.h.b16 %v108
    %v393 = vunpack.c.l.b16 %v109
    %v394 = vunpack.c.h.b16 %v109
    %v395 = vunpack.c.l.b16 %v110
    %v396 = vunpack.c.h.b16 %v110
    %v397 = vunpack.c.l.b16 %v111
    %v398 = vunpack.c.h.b16 %v111
    %v399 = vunpack.c.l.b16 %v112
    %v400 = vunpack.c.h.b16 %v112
    %v401 = vunpack.c.l.b16 %v113
    %v402 = vunpack.c.h.b16 %v113
    %v403 = vunpack.c.l.b16 %v114
    %v404 = vunpack.c.h.b16 %v114
    %v405 = vunpack.c.l.b16 %v115
    %v406 = vunpack.c.h.b16 %v115
    %v407 = vunpack.c.l.b16 %v116
    %v408 = vunpack.c.h.b16 %v116
    %v409 = vunpack.c.l.b16 %v117
    %v410 = vunpack.c.h.b16 %v117
    %v411 = vunpack.c.l.b16 %v118
    %v412 = vunpack.c.h.b16 %v118
    %v413 = vunpack.c.l.b16 %v119
    %v414 = vunpack.c.h.b16 %v119
    %v415 = vunpack.c.l.b16 %v120
    %v416 = vunpack.c.h.b16 %v120
    %v417 = vunpack.c.l.b16 %v121
    %v418 = vunpack.c.h.b16 %v121
    %v419 = vunpack.c.l.b16 %v122
    %v420 = vunpack.c.h.b16 %v122
    %v421 = vunpack.c.l.b16 %v123
    %v422 = vunpack.c.h.b16 %v123
    %v423 = vunpack.c.l.b16 %v124
    %v424 = vunpack.c.h.b16 %v124
    %v425 = vunpack.c.l.b16 %v125
    %v426 = vunpack.c.h.b16 %v125
    %v427 = vunpack.c.l.b16 %v126
    %v428 = vunpack.c.h.b16 %v126
    %v429 = vunpack.c.l.b16 %v127
    %v430 = vunpack.c.h.b16 %v127
    %v431 = vunpack.c.l.b16 %v128
    %v432 = vunpack.c.h.b16 %v128
    %v433 = vunpack.c.l.b16 %v129
    %v434 = vunpack.c.h.b16 %v129
    %v435 = vunpack.c.l.b16 %v130
    %v436 = vunpack.c.h.b16 %v130
    %v437 = vunpack.c.l.b16 %v131
    %v438 = vunpack.c.h.b16 %v131
    %v439 = vunpack.c.l.b16 %v132
    %v440 = vunpack.c.h.b16 %v132
    %v441 = vunpack.c.l.b16 %v133
    %v442 = vunpack.c.h.b16 %v133
    %v443 = vunpack.c.l.b16 %v134
    %v444 = vunpack.c.h.b16 %v134
    %v445 = vunpack.c.l.b16 %v135
    %v446 = vunpack.c.h.b16 %v135
    %v447 = vunpack.c.l.b16 %v136
    %v448 = vunpack.c.h.b16 %v136
    %v449 = vunpack.c.l.b16 %v137
    %v450 = vunpack.c.h.b16 %v137
    %v451 = vunpack.c.l.b16 %v138
    %v452 = vunpack.c.h.b16 %v138
    %v453 = vunpack.c.l.b16 %v139
    %v454 = vunpack.c.h.b16 %v139
    %v455 = vunpack.c.l.b16 %v140
    %v456 = vunpack.c.h.b16 %v140
    %v457 = vunpack.c.l.b16 %v141
    %v458 = vunpack.c.h.b16 %v141
    %v459 = vunpack.c.l.b16 %v142
    %v460 = vunpack.c.h.b16 %v142
    %v461 = vunpack.c.l.b16 %v143
    %v462 = vunpack.c.h.b16 %v143
    %v463 = vunpack.c.l.b16 %v144
    %v464 = vunpack.c.h.b16 %v144
    %v465 = vunpack.c.l.b16 %v145
    %v466 = vunpack.c.h.b16 %v145
    %v467 = vunpack.c.l.b16 %v146
    %v468 = vunpack.c.h.b16 %v146
    %v469 = vunpack.c.l.b16 %v147
    %v470 = vunpack.c.h.b16 %v147
    %v471 = vunpack.c.l.b16 %v148
    %v472 = vunpack.c.h.b16 %v148
    %v473 = vunpack.c.l.b16 %v149
    %v474 = vunpack.c.h.b16 %v149
    %v475 = vunpack.c.l.b16 %v150
    %v476 = vunpack.c.h.b16 %v150
    %v477 = vunpack.c.l.b16 %v151
    %v478 = vunpack.c.h.b16 %v151
    %v479 = vunpack.c.l.b16 %v152
    %v480 = vunpack.c.h.b16 %v152
    %v481 = vunpack.c.l.b16 %v153
    %v482 = vunpack.c.h.b16 %v153
    %v483 = vunpack.c.l.b16 %v154
    %v484 = vunpack.c.h.b16 %v154
    %v485 = vunpack.c.l.b16 %v155
    %v486 = vunpack.c.h.b16 %v155
    %v487 = vunpack.c.l.b16 %v156
    %v488 = vunpack.c.h.b16 %v156
    %v489 = vunpack.c.l.b16 %v157
    %v490 = vunpack.c.h.b16 %v157
    %v491 = vunpack.c.l.b16 %v158
    %v492 = vunpack.c.h.b16 %v158
    %v493 = vunpack.c.l.b16 %v159
    %v494 = vunpack.c.h.b16 %v159
    %v495 = vunpack.c.l.b16 %v160
    %v496 = vunpack.c.h.b16 %v160
    %v497 = vunpack.c.l.b16 %v161
    %v498 = vunpack.c.h.b16 %v161
    %v499 = vunpack.c.l.b16 %v162
    %v500 = vunpack.c.h.b16 %v162
    %v501 = vunpack.c.l.b16 %v163
    %v502 = vunpack.c.h.b16 %v163
    %v503 = vunpack.c.l.b16 %v164
    %v504 = vunpack.c.h.b16 %v164
    %v505 = vunpack.c.l.b16 %v165
    %v506 = vunpack.c.h.b16 %v165
    %v507 = vunpack.c.l.b16 %v166
    %v508 = vunpack.c.h.b16 %v166
    %v509 = vunpack.c.l.b16 %v167
    %v510 = vunpack.c.h.b16 %v167
    %v511 = vunpack.c.l.b16 %v168
    %v512 = vunpack.c.h.b16 %v168
    %v513 = vunpack.c.l.b16 %v169
    %v514 = vunpack.c.h.b16 %v169
    %v515 = vunpack.c.l.b16 %v170
    %v516 = vunpack.c.h.b16 %v170
    %v517 = vunpack.c.l.b16 %v171
    %v518 = vunpack.c.h.b16 %v171
    %v519 = vunpack.c.l.b16 %v172
    %v520 = vunpack.c.h.b16 %v172
    %v521 = vunpack.c.l.b16 %v173
    %v522 = vunpack.c.h.b16 %v173
    %v523 = vunpack.c.l.b16 %v174
    %v524 = vunpack.c.h.b16 %v174
    %v525 = vunpack.c.l.b16 %v175
    %v526 = vunpack.c.h.b16 %v175
    %v527 = vunpack.c.l.b16 %v176
    %v528 = vunpack.c.h.b16 %v176
    %v529 = vunpack.c.l.b16 %v177
    %v530 = vunpack.c.h.b16 %v177
    %v531 = vunpack.c.l.b16 %v178
    %v532 = vunpack.c.h.b16 %v178
    %v533 = vunpack.c.l.b16 %v179
    %v534 = vunpack.c.h.b16 %v179
    %v535 = vunpack.c.l.b16 %v180
    %v536 = vunpack.c.h.b16 %v180
    %v537 = vunpack.c.l.b16 %v181
    %v538 = vunpack.c.h.b16 %v181
    %v539 = vunpack.c.l.b16 %v182
    %v540 = vunpack.c.h.b16 %v182
    %v541 = vunpack.c.l.b16 %v183
    %v542 = vunpack.c.h.b16 %v183
    %v543 = vunpack.c.l.b16 %v184
    %v544 = vunpack.c.h.b16 %v184
    %v545 = vunpack.c.l.b16 %v185
    %v546 = vunpack.c.h.b16 %v185
    %v547 = vunpack.c.l.b16 %v186
    %v548 = vunpack.c.h.b16 %v186
    %v549 = vunpack.c.l.b16 %v187
    %v550 = vunpack.c.h.b16 %v187
    %v551 = vunpack.c.l.b16 %v188
    %v552 = vunpack.c.h.b16 %v188
    %v553 = vunpack.c.l.b16 %v189
    %v554 = vunpack.c.h.b16 %v189
    %v555 = vunpack.c.l.b16 %v190
    %v556 = vunpack.c.h.b16 %v190
    %v557 = vunpack.c.l.b16 %v191
    %v558 = vunpack.c.h.b16 %v191
    %v559 = vunpack.c.l.b16 %v192
    %v560 = vunpack.c.h.b16 %v192
    %v561 = vunpack.c.l.b16 %v193
    %v562 = vunpack.c.h.b16 %v193
    %v563 = vunpack.c.l.b16 %v194
    %v564 = vunpack.c.h.b16 %v194
    %v565 = vunpack.c.l.b16 %v195
    %v566 = vunpack.c.h.b16 %v195
    %v567 = vunpack.c.l.b16 %v196
    %v568 = vunpack.c.h.b16 %v196
    %v569 = vunpack.c.l.b16 %v197
    %v570 = vunpack.c.h.b16 %v197
    %v571 = vpack.c.b16 %v349, %v347
    %v572 = vpack.c.b16 %v350, %v348
    %v573 = vpack.c.b16 %v353, %v351
    %v574 = vpack.c.b16 %v354, %v352
    %v575 = vpack.c.b16 %v357, %v355
    %v576 = vpack.c.b16 %v358, %v356
    %v577 = vpack.c.b16 %v361, %v359
    %v578 = vpack.c.b16 %v362, %v360
    %v579 = vpack.c.b16 %v365, %v363
    %v580 = vpack.c.b16 %v366, %v364
    %v581 = vpack.c.b16 %v369, %v367
    %v582 = vpack.c.b16 %v370, %v368
    %v583 = vpack.c.b16 %v373, %v371
    %v584 = vpack.c.b16 %v374, %v372
    %v585 = vpack.c.b16 %v377, %v375
    %v586 = vpack.c.b16 %v378, %v376
    %v587 = vpack.c.b16 %v381, %v379
    %v588 = vpack.c.b16 %v382, %v380
    %v589 = vpack.c.b16 %v385, %v383
    %v590 = vpack.c.b16 %v386, %v384
    %v591 = vpack.c.b16 %v389, %v387
    %v592 = vpack.c.b16 %v390, %v388
    %v593 = vpack.c.b16 %v393, %v391
    %v594 = vpack.c.b16 %v394, %v392
    %v595 = vpack.c.b16 %v397, %v395
    %v596 = vpack.c.b16 %v398, %v396
    %v597 = vpack.c.b16 %v401, %v399
    %v598 = vpack.c.b16 %v402, %v400
    %v599 = vpack.c.b16 %v405, %v403
    %v600 = vpack.c.b16 %v406, %v404
    %v601 = vpack.c.b16 %v409, %v407
    %v602 = vpack.c.b16 %v410, %v408
    %v603 = vpack.c.b16 %v413, %v411
    %v604 = vpack.c.b16 %v414, %v412
    %v605 = vpack.c.b16 %v417, %v415
    %v606 = vpack.c.b16 %v418, %v416
    %v607 = vpack.c.b16 %v421, %v419
    %v608 = vpack.c.b16 %v422, %v420
    %v609 = vpack.c.b16 %v425, %v423
    %v610 = vpack.c.b16 %v426, %v424
    %v611 = vpack.c.b16 %v429, %v427
    %v612 = vpack.c.b16 %v430, %v428
    %v613 = vpack.c.b16 %v433, %v431
    %v614 = vpack.c.b16 %v434, %v432
    %v615 = vpack.c.b16 %v437, %v435
    %v616 = vpack.c.b16 %v438, %v436
    %v617 = vpack.c.b16 %v441, %v439
    %v618 = vpack.c.b16 %v442, %v440
    %v619 = vpack.c.b16 %v445, %v443
    %v620 = vpack.c.b16 %v446, %v444
    %v621 = vpack.c.b16 %v449, %v447
    %v622 = vpack.c.b16 %v450, %v448
    %v623 = vpack.c.b16 %v453, %v451
    %v624 = vpack.c.b16 %v454, %v452
    %v625 = vpack.c.b16 %v457, %v455
    %v626 = vpack.c.b16 %v458, %v456
    %v627 = vpack.c.b16 %v461, %v459
    %v628 = vpack.c.b16 %v462, %v460
    %v629 = vpack.c.b16 %v465, %v463
    %v630 = vpack.c.b16 %v466, %v464
    %v631 = vpack.c.b16 %v469, %v467
    %v632 = vpack.c.b16 %v470, %v468
    %v633 = vpack.c.b16 %v473, %v471
    %v634 = vpack.c.b16 %v474, %v472
    %v635 = vpack.c.b16 %v477, %v475
    %v636 = vpack.c.b16 %v478, %v476
    %v637 = vpack.c.b16 %v481, %v479
    %v638 = vpack.c.b16 %v482, %v480
    %v639 = vpack.c.b16 %v485, %v483
    %v640 = vpack.c.b16 %v486, %v484
    %v641 = vpack.c.b16 %v489, %v487
    %v642 = vpack.c.b16 %v490, %v488
    %v643 = vpack.c.b16 %v493, %v491
    %v644 = vpack.c.b16 %v494, %v492
    %v645 = vpack.c.b16 %v497, %v495
    %v646 = vpack.c.b16 %v498, %v496
    %v647 = vpack.c.b16 %v501, %v499
    %v648 = vpack.c.b16 %v502, %v500
    %v649 = vpack.c.b16 %v505, %v503
    %v650 = vpack.c.b16 %v506, %v504
    %v651 = vpack.c.b16 %v509, %v507
    %v652 = vpack.c.b16 %v510, %v508
    %v653 = vpack.c.b16 %v513, %v511
    %v654 = vpack.c.b16 %v514, %v512
    %v655 = vpack.c.b16 %v517, %v515
    %v656 = vpack.c.b16 %v518, %v516
    %v657 = vpack.c.b16 %v521, %v519
    %v658 = vpack.c.b16 %v522, %v520
    %v659 = vpack.c.b16 %v525, %v523
    %v660 = vpack.c.b16 %v526, %v524
    %v661 = vpack.c.b16 %v529, %v527
    %v662 = vpack.c.b16 %v530, %v528
    %v663 = vpack.c.b16 %v533, %v531
    %v664 = vpack.c.b16 %v534, %v532
    %v665 = vpack.c.b16 %v537, %v535
    %v666 = vpack.c.b16 %v538, %v536
    %v667 = vpack.c.b16 %v541, %v539
    %v668 = vpack.c.b16 %v542, %v540
    %v669 = vpack.c.b16 %v545, %v543
    %v670 = vpack.c.b16 %v546, %v544
    %v671 = vpack.c.b16 %v549, %v547
    %v672 = vpack.c.b16 %v550, %v548
    %v673 = vpack.c.b16 %v553, %v551
    %v674 = vpack.c.b16 %v554, %v552
    %v675 = vpack.c.b16 %v557, %v555
    %v676 = vpack.c.b16 %v558, %v556
    %v677 = vpack.c.b16 %v561, %v559
    %v678 = vpack.c.b16 %v562, %v560
    %v679 = vpack.c.b16 %v565, %v563
    %v680 = vpack.c.b16 %v566, %v564
    %v681 = vpack.c.b16 %v569, %v567
    %v682 = vpack.c.b16 %v570, %v568
    %795 = vmatprep.subr.bf16.mxu0 %v572
    %796 = vmatpush1.bf16.msra.mxu0 %v571
    %797 = vmatprep.subr.bf16.mxu0 %v574
    %798 = vmatpush1.bf16.msra.mxu0 %v573
    %799 = vmatprep.subr.bf16.mxu0 %v576
    %800 = vmatpush1.bf16.msra.mxu0 %v575
    %801 = vmatprep.subr.bf16.mxu0 %v578
    %802 = vmatpush1.bf16.msra.mxu0 %v577
    %803 = vmatprep.subr.bf16.mxu0 %v580
    %804 = vmatpush1.bf16.msra.mxu0 %v579
    %805 = vmatprep.subr.bf16.mxu0 %v582
    %806 = vmatpush1.bf16.msra.mxu0 %v581
    %807 = vmatprep.subr.bf16.mxu0 %v584
    %808 = vmatpush1.bf16.msra.mxu0 %v583
    %809 = vmatprep.subr.bf16.mxu0 %v586
    %810 = vmatpush1.bf16.msra.mxu0 %v585
    %811 = vmatprep.subr.bf16.mxu0 %v588
    %812 = vmatpush1.bf16.msra.mxu0 %v587
    %813 = vmatprep.subr.bf16.mxu0 %v590
    %814 = vmatpush1.bf16.msra.mxu0 %v589
    %815 = vmatprep.subr.bf16.mxu0 %v592
    %816 = vmatpush1.bf16.msra.mxu0 %v591
    %817 = vmatprep.subr.bf16.mxu0 %v594
    %818 = vmatpush1.bf16.msra.mxu0 %v593
    %819 = vmatprep.subr.bf16.mxu0 %v596
    %820 = vmatpush1.bf16.msra.mxu0 %v595
    %821 = vmatprep.subr.bf16.mxu0 %v598
    %822 = vmatpush1.bf16.msra.mxu0 %v597
    %823 = vmatprep.subr.bf16.mxu0 %v600
    %824 = vmatpush1.bf16.msra.mxu0 %v599
    %825 = vmatprep.subr.bf16.mxu0 %v602
    %826 = vmatpush1.bf16.msra.mxu0 %v601
    %827 = vmatprep.mubr.bf16.mxu0 %v222
    %828 = vmatmul.mubr.bf16.gmra.mrb[0].mxu0 %v221
    %v829 = vpop.f32.mrb[0].mxu0
    %v830 = vadd.f32 %v205, %v829
    %v831 = vpop.f32.mrb[0].mxu0
    %v832 = vadd.f32 %v209, %v831
    %v833 = vpop.f32.mrb[0].mxu0
    %v834 = vpop.f32.mrb[0].mxu0
    %835 = vdwg.mxu0
    %836 = vmatprep.subr.bf16.mxu0 %v604
    %837 = vmatpush1.bf16.msra.mxu0 %v603
    %838 = vmatprep.subr.bf16.mxu0 %v606
    %839 = vmatpush1.bf16.msra.mxu0 %v605
    %840 = vmatprep.subr.bf16.mxu0 %v608
    %841 = vmatpush1.bf16.msra.mxu0 %v607
    %842 = vmatprep.subr.bf16.mxu0 %v610
    %843 = vmatpush1.bf16.msra.mxu0 %v609
    %844 = vmatprep.subr.bf16.mxu0 %v612
    %845 = vmatpush1.bf16.msra.mxu0 %v611
    %846 = vmatprep.subr.bf16.mxu0 %v614
    %847 = vmatpush1.bf16.msra.mxu0 %v613
    %848 = vmatprep.subr.bf16.mxu0 %v616
    %849 = vmatpush1.bf16.msra.mxu0 %v615
    %850 = vmatprep.subr.bf16.mxu0 %v618
    %851 = vmatpush1.bf16.msra.mxu0 %v617
    %852 = vmatprep.subr.bf16.mxu0 %v620
    %853 = vmatpush1.bf16.msra.mxu0 %v619
    %854 = vmatprep.subr.bf16.mxu0 %v622
    %855 = vmatpush1.bf16.msra.mxu0 %v621
    %856 = vmatprep.subr.bf16.mxu0 %v624
    %857 = vmatpush1.bf16.msra.mxu0 %v623
    %858 = vmatprep.subr.bf16.mxu0 %v626
    %859 = vmatpush1.bf16.msra.mxu0 %v625
    %860 = vmatprep.subr.bf16.mxu0 %v628
    %861 = vmatpush1.bf16.msra.mxu0 %v627
    %862 = vmatprep.subr.bf16.mxu0 %v630
    %863 = vmatpush1.bf16.msra.mxu0 %v629
    %864 = vmatprep.subr.bf16.mxu0 %v632
    %865 = vmatpush1.bf16.msra.mxu0 %v631
    %866 = vmatprep.subr.bf16.mxu0 %v634
    %867 = vmatpush1.bf16.msra.mxu0 %v633
    %868 = vmatprep.mubr.bf16.mxu0 %v224
    %869 = vmatmul.mubr.bf16.gmra.mrb[0].mxu0 %v223
    %v870 = vpop.f32.mrb[0].mxu0
    %v871 = vadd.f32 %v830, %v870
    %v872 = vpop.f32.mrb[0].mxu0
    %v873 = vadd.f32 %v832, %v872
    %v874 = vpop.f32.mrb[0].mxu0
    %v875 = vpop.f32.mrb[0].mxu0
    %876 = vdwg.mxu0
    %877 = vmatprep.subr.bf16.mxu0 %v636
    %878 = vmatpush1.bf16.msra.mxu0 %v635
    %879 = vmatprep.subr.bf16.mxu0 %v638
    %880 = vmatpush1.bf16.msra.mxu0 %v637
    %881 = vmatprep.subr.bf16.mxu0 %v640
    %882 = vmatpush1.bf16.msra.mxu0 %v639
    %883 = vmatprep.subr.bf16.mxu0 %v642
    %884 = vmatpush1.bf16.msra.mxu0 %v641
    %885 = vmatprep.subr.bf16.mxu0 %v644
    %886 = vmatpush1.bf16.msra.mxu0 %v643
    %887 = vmatprep.subr.bf16.mxu0 %v646
    %888 = vmatpush1.bf16.msra.mxu0 %v645
    %889 = vmatprep.subr.bf16.mxu0 %v648
    %890 = vmatpush1.bf16.msra.mxu0 %v647
    %891 = vmatprep.subr.bf16.mxu0 %v650
    %892 = vmatpush1.bf16.msra.mxu0 %v649
    %893 = vmatprep.subr.bf16.mxu0 %v652
    %894 = vmatpush1.bf16.msra.mxu0 %v651
    %895 = vmatprep.subr.bf16.mxu0 %v654
    %896 = vmatpush1.bf16.msra.mxu0 %v653
    %897 = vmatprep.subr.bf16.mxu0 %v656
    %898 = vmatpush1.bf16.msra.mxu0 %v655
    %899 = vmatprep.subr.bf16.mxu0 %v658
    %900 = vmatpush1.bf16.msra.mxu0 %v657
    %901 = vmatprep.subr.bf16.mxu0 %v660
    %902 = vmatpush1.bf16.msra.mxu0 %v659
    %903 = vmatprep.subr.bf16.mxu0 %v662
    %904 = vmatpush1.bf16.msra.mxu0 %v661
    %905 = vmatprep.subr.bf16.mxu0 %v664
    %906 = vmatpush1.bf16.msra.mxu0 %v663
    %907 = vmatprep.subr.bf16.mxu0 %v666
    %908 = vmatpush1.bf16.msra.mxu0 %v665
    %909 = vmatprep.mubr.bf16.mxu0 %v226
    %910 = vmatmul.mubr.bf16.gmra.mrb[0].mxu0 %v225
    %v911 = vpop.f32.mrb[0].mxu0
    %v912 = vadd.f32 %v871, %v911
    %v913 = vpop.f32.mrb[0].mxu0
    %v914 = vadd.f32 %v873, %v913
    %v915 = vpop.f32.mrb[0].mxu0
    %v916 = vpop.f32.mrb[0].mxu0
    %917 = vdwg.mxu0
    %918 = vmatprep.subr.bf16.mxu0 %v668
    %919 = vmatpush1.bf16.msra.mxu0 %v667
    %920 = vmatprep.subr.bf16.mxu0 %v670
    %921 = vmatpush1.bf16.msra.mxu0 %v669
    %922 = vmatprep.subr.bf16.mxu0 %v672
    %923 = vmatpush1.bf16.msra.mxu0 %v671
    %924 = vmatprep.subr.bf16.mxu0 %v674
    %925 = vmatpush1.bf16.msra.mxu0 %v673
    %926 = vmatprep.subr.bf16.mxu0 %v676
    %927 = vmatpush1.bf16.msra.mxu0 %v675
    %928 = vmatprep.subr.bf16.mxu0 %v678
    %929 = vmatpush1.bf16.msra.mxu0 %v677
    %930 = vmatprep.subr.bf16.mxu0 %v680
    %931 = vmatpush1.bf16.msra.mxu0 %v679
    %932 = vmatprep.subr.bf16.mxu0 %v682
    %933 = vmatpush1.bf16.msra.mxu0 %v681
    %934 = vmatprep.subr.bf16.mxu0 0
    %935 = vmatpush1.bf16.msra.mxu0 0
    %936 = vmatprep.subr.bf16.mxu0 0
    %937 = vmatpush1.bf16.msra.mxu0 0
    %938 = vmatprep.subr.bf16.mxu0 0
    %939 = vmatpush1.bf16.msra.mxu0 0
    %940 = vmatprep.subr.bf16.mxu0 0
    %941 = vmatpush1.bf16.msra.mxu0 0
    %942 = vmatprep.subr.bf16.mxu0 0
    %943 = vmatpush1.bf16.msra.mxu0 0
    %944 = vmatprep.subr.bf16.mxu0 0
    %945 = vmatpush1.bf16.msra.mxu0 0
    %946 = vmatprep.subr.bf16.mxu0 0
    %947 = vmatpush1.bf16.msra.mxu0 0
    %948 = vmatprep.subr.bf16.mxu0 0
    %949 = vmatpush1.bf16.msra.mxu0 0
    %950 = vmatprep.mubr.bf16.mxu0 0
    %951 = vmatmul.mubr.bf16.gmra.mrb[0].mxu0 %v227
    %v952 = vpop.f32.mrb[0].mxu0
    %v953 = vadd.f32 %v912, %v952
    %v954 = vpop.f32.mrb[0].mxu0
    %v955 = vadd.f32 %v914, %v954
    %v956 = vpop.f32.mrb[0].mxu0
    %v957 = vpop.f32.mrb[0].mxu0
    %958 = vdwg.mxu0
    %v959 = vmax.f32 %v953, 0.0
    %v960 = vmax.f32 %v955, 0.0
    %v961 = vmin.f32 %v959, 8.0
    %v962 = vmin.f32 %v960, 8.0
    %v963 = vpack.c.bf16 %v961, %v961
    %v964 = vpack.c.bf16 %v962, %v962
    %v965 = vpack.c.bf16 %v200, %v198
    %v966 = vpack.c.bf16 %v201, %v199
    %v968 = vpack.i.b16 %v965, %v965
    %v970 = vlaneseq
    %v971 = vshrl.u32 %v970, 7
    %v972 = vsub.s32 1, %v971
    %v973 = vrot.slane %v968, %v972
    %v975 = vpack.i.b16 %v966, %v966
    %v977 = vlaneseq
    %v978 = vshrl.u32 %v977, 7
    %v979 = vsub.s32 1, %v978
    %v980 = vrot.slane %v975, %v979
    %v981 = vmul.bf16 %v973, %v963
    %v982 = vmul.bf16 %v980, %v964
    %v983 = vshrl.u32 %v965, 16
    %v984 = vpack.i.b16 %v983, %v983
    %v986 = vlaneseq
    %v987 = vshrl.u32 %v986, 7
    %v988 = vsub.s32 0, %v987
    %v989 = vrot.slane %v984, %v988
    %v990 = vshrl.u32 %v966, 16
    %v991 = vpack.i.b16 %v990, %v990
    %v993 = vlaneseq
    %v994 = vshrl.u32 %v993, 7
    %v995 = vsub.s32 0, %v994
    %v996 = vrot.slane %v991, %v995
    %v997 = vadd.bf16 %v989, %v981
    %v998 = vadd.bf16 %v996, %v982
    %v999 = vsub.bf16 %v963, 1065369472
    %v1000 = vsub.bf16 %v964, 1065369472
    %v1001 = vmax.bf16 %v999, 0
    %v1002 = vmax.bf16 %v1000, 0
    %v1003 = vlaneseq
    %v1004 = vshrl.u32 %v1003, 7
    %v1005 = vsub.s32 1, %v1004
    %v1006 = vrot.slane %v984, %v1005
    %v1007 = vlaneseq
    %v1008 = vshrl.u32 %v1007, 7
    %v1009 = vsub.s32 1, %v1008
    %v1010 = vrot.slane %v991, %v1009
    %v1011 = vmul.bf16 %v1006, %v1001
    %v1012 = vmul.bf16 %v1010, %v1002
    %v1013 = vadd.bf16 %v997, %v1011
    %v1014 = vadd.bf16 %v998, %v1012
    %v1015 = vsub.bf16 %v963, 1073758208
    %v1016 = vsub.bf16 %v964, 1073758208
    %v1017 = vmax.bf16 %v1015, 0
    %v1018 = vmax.bf16 %v1016, 0
    %v1019 = vlaneseq
    %v1020 = vshrl.u32 %v1019, 7
    %v1021 = vsub.s32 2, %v1020
    %v1022 = vrot.slane %v968, %v1021
    %v1023 = vlaneseq
    %v1024 = vshrl.u32 %v1023, 7
    %v1025 = vsub.s32 2, %v1024
    %v1026 = vrot.slane %v975, %v1025
    %v1027 = vmul.bf16 %v1022, %v1017
    %v1028 = vmul.bf16 %v1026, %v1018
    %v1029 = vadd.bf16 %v1013, %v1027
    %v1030 = vadd.bf16 %v1014, %v1028
    %v1031 = vsub.bf16 %v963, 1077952576
    %v1032 = vsub.bf16 %v964, 1077952576
    %v1033 = vmax.bf16 %v1031, 0
    %v1034 = vmax.bf16 %v1032, 0
    %v1035 = vlaneseq
    %v1036 = vshrl.u32 %v1035, 7
    %v1037 = vsub.s32 2, %v1036
    %v1038 = vrot.slane %v984, %v1037
    %v1039 = vlaneseq
    %v1040 = vshrl.u32 %v1039, 7
    %v1041 = vsub.s32 2, %v1040
    %v1042 = vrot.slane %v991, %v1041
    %v1043 = vmul.bf16 %v1038, %v1033
    %v1044 = vmul.bf16 %v1042, %v1034
    %v1045 = vadd.bf16 %v1029, %v1043
    %v1046 = vadd.bf16 %v1030, %v1044
    %v1047 = vsub.bf16 %v963, 1082146944
    %v1048 = vsub.bf16 %v964, 1082146944
    %v1049 = vmax.bf16 %v1047, 0
    %v1050 = vmax.bf16 %v1048, 0
    %v1051 = vlaneseq
    %v1052 = vshrl.u32 %v1051, 7
    %v1053 = vsub.s32 3, %v1052
    %v1054 = vrot.slane %v968, %v1053
    %v1055 = vlaneseq
    %v1056 = vshrl.u32 %v1055, 7
    %v1057 = vsub.s32 3, %v1056
    %v1058 = vrot.slane %v975, %v1057
    %v1059 = vmul.bf16 %v1054, %v1049
    %v1060 = vmul.bf16 %v1058, %v1050
    %v1061 = vadd.bf16 %v1045, %v1059
    %v1062 = vadd.bf16 %v1046, %v1060
    %v1063 = vsub.bf16 %v963, 1084244128
    %v1064 = vsub.bf16 %v964, 1084244128
    %v1065 = vmax.bf16 %v1063, 0
    %v1066 = vmax.bf16 %v1064, 0
    %v1067 = vlaneseq
    %v1068 = vshrl.u32 %v1067, 7
    %v1069 = vsub.s32 3, %v1068
    %v1070 = vrot.slane %v984, %v1069
    %v1071 = vlaneseq
    %v1072 = vshrl.u32 %v1071, 7
    %v1073 = vsub.s32 3, %v1072
    %v1074 = vrot.slane %v991, %v1073
    %v1075 = vmul.bf16 %v1070, %v1065
    %v1076 = vmul.bf16 %v1074, %v1066
    %v1077 = vadd.bf16 %v1061, %v1075
    %v1078 = vadd.bf16 %v1062, %v1076
    %v1079 = vsub.bf16 %v963, 1086341312
    %v1080 = vsub.bf16 %v964, 1086341312
    %v1081 = vmax.bf16 %v1079, 0
    %v1082 = vmax.bf16 %v1080, 0
    %v1083 = vlaneseq
    %v1084 = vshrl.u32 %v1083, 7
    %v1085 = vsub.s32 4, %v1084
    %v1086 = vrot.slane %v968, %v1085
    %v1087 = vlaneseq
    %v1088 = vshrl.u32 %v1087, 7
    %v1089 = vsub.s32 4, %v1088
    %v1090 = vrot.slane %v975, %v1089
    %v1091 = vmul.bf16 %v1086, %v1081
    %v1092 = vmul.bf16 %v1090, %v1082
    %v1093 = vadd.bf16 %v1077, %v1091
    %v1094 = vadd.bf16 %v1078, %v1092
    %v1095 = vsub.bf16 %v963, 1088438496
    %v1096 = vsub.bf16 %v964, 1088438496
    %v1097 = vmax.bf16 %v1095, 0
    %v1098 = vmax.bf16 %v1096, 0
    %v1099 = vlaneseq
    %v1100 = vshrl.u32 %v1099, 7
    %v1101 = vsub.s32 4, %v1100
    %v1102 = vrot.slane %v984, %v1101
    %v1103 = vlaneseq
    %v1104 = vshrl.u32 %v1103, 7
    %v1105 = vsub.s32 4, %v1104
    %v1106 = vrot.slane %v991, %v1105
    %v1107 = vmul.bf16 %v1102, %v1097
    %v1108 = vmul.bf16 %v1106, %v1098
    %v1109 = vadd.bf16 %v1093, %v1107
    %v1110 = vadd.bf16 %v1094, %v1108
    %v1111 = vld [vmem:[#allocation5] sm:$0xf]
    %v1112 = vld [vmem:[#allocation5 + $0x4] sm:$0xf]
    %v1113 = vld [vmem:[#allocation5 + $0x8] sm:$0xf]
    %v1114 = vld [vmem:[#allocation5 + $0xc] sm:$0xf]
    %v1115 = vld [vmem:[#allocation5 + $0x10] sm:$0xf]
    %v1116 = vld [vmem:[#allocation5 + $0x14] sm:$0xf]
    %v1117 = vld [vmem:[#allocation5 + $0x18] sm:$0xf]
    %v1118 = vld [vmem:[#allocation5 + $0x1c] sm:$0xf]
    %v1119 = vld [vmem:[#allocation5 + $0x20] sm:$0xf]
    %v1120 = vld [vmem:[#allocation5 + $0x24] sm:$0xf]
    %v1121 = vld [vmem:[#allocation5 + $0x28] sm:$0xf]
    %v1122 = vld [vmem:[#allocation5 + $0x2c] sm:$0xf]
    %v1123 = vld [vmem:[#allocation5 + $0x30] sm:$0xf]
    %v1124 = vld [vmem:[#allocation5 + $0x34] sm:$0xf]
    %v1125 = vld [vmem:[#allocation5 + $0x38] sm:$0xf]
    %v1126 = vld [vmem:[#allocation5 + $0x3c] sm:$0xf]
    %v1127 = vld [vmem:[#allocation5 + $0x40] sm:$0xf]
    %v1128 = vld [vmem:[#allocation5 + $0x44] sm:$0xf]
    %v1129 = vld [vmem:[#allocation5 + $0x48] sm:$0xf]
    %v1130 = vld [vmem:[#allocation5 + $0x4c] sm:$0xf]
    %v1131 = vld [vmem:[#allocation5 + $0x50] sm:$0xf]
    %v1132 = vld [vmem:[#allocation5 + $0x54] sm:$0xf]
    %v1133 = vld [vmem:[#allocation5 + $0x58] sm:$0xf]
    %v1134 = vld [vmem:[#allocation5 + $0x5c] sm:$0xf]
    %v1135 = vld [vmem:[#allocation5 + $0x60] sm:$0xf]
    %v1136 = vld [vmem:[#allocation5 + $0x64] sm:$0xf]
    %v1137 = vld [vmem:[#allocation5 + $0x68] sm:$0xf]
    %v1138 = vld [vmem:[#allocation5 + $0x6c] sm:$0xf]
    %v1139 = vld [vmem:[#allocation5 + $0x70] sm:$0xf]
    %v1140 = vld [vmem:[#allocation5 + $0x74] sm:$0xf]
    %v1141 = vld [vmem:[#allocation5 + $0x78] sm:$0xf]
    %v1142 = vld [vmem:[#allocation5 + $0x7c] sm:$0xf]
    %v1143 = vld [vmem:[%s4] sm:$0xff]
    %v1144 = vld [vmem:[%s4 + $0x8] sm:$0x3]
    %v1145 = vlaneseq
    %v1146 = vshrl.u32 %v1145, 7
    %v1147 = vsub.s32 0, %v1146
    %v1148 = vrot.slane %v1143, %v1147
    %v1181 = vunpack.c.l.b16 %v1111
    %v1182 = vunpack.c.l.b16 %v1112
    %v1183 = vunpack.c.l.b16 %v1113
    %v1184 = vunpack.c.l.b16 %v1114
    %v1185 = vunpack.c.l.b16 %v1115
    %v1186 = vunpack.c.l.b16 %v1116
    %v1187 = vunpack.c.l.b16 %v1117
    %v1188 = vunpack.c.l.b16 %v1118
    %v1189 = vunpack.c.l.b16 %v1119
    %v1190 = vunpack.c.l.b16 %v1120
    %v1191 = vunpack.c.l.b16 %v1121
    %v1192 = vunpack.c.l.b16 %v1122
    %v1193 = vunpack.c.l.b16 %v1123
    %v1194 = vunpack.c.l.b16 %v1124
    %v1195 = vunpack.c.l.b16 %v1125
    %v1196 = vunpack.c.l.b16 %v1126
    %v1197 = vunpack.c.l.b16 %v1127
    %v1198 = vunpack.c.l.b16 %v1128
    %v1199 = vunpack.c.l.b16 %v1129
    %v1200 = vunpack.c.l.b16 %v1130
    %v1201 = vunpack.c.l.b16 %v1131
    %v1202 = vunpack.c.l.b16 %v1132
    %v1203 = vunpack.c.l.b16 %v1133
    %v1204 = vunpack.c.l.b16 %v1134
    %v1205 = vunpack.c.l.b16 %v1135
    %v1206 = vunpack.c.l.b16 %v1136
    %v1207 = vunpack.c.l.b16 %v1137
    %v1208 = vunpack.c.l.b16 %v1138
    %v1209 = vunpack.c.l.b16 %v1139
    %v1210 = vunpack.c.l.b16 %v1140
    %v1211 = vunpack.c.l.b16 %v1141
    %v1212 = vunpack.c.l.b16 %v1142
    %v1213 = vpack.c.b16 %v1182, %v1181
    %v1214 = vpack.c.b16 %v1184, %v1183
    %v1215 = vpack.c.b16 %v1186, %v1185
    %v1216 = vpack.c.b16 %v1188, %v1187
    %v1217 = vpack.c.b16 %v1190, %v1189
    %v1218 = vpack.c.b16 %v1192, %v1191
    %v1219 = vpack.c.b16 %v1194, %v1193
    %v1220 = vpack.c.b16 %v1196, %v1195
    %v1221 = vpack.c.b16 %v1198, %v1197
    %v1222 = vpack.c.b16 %v1200, %v1199
    %v1223 = vpack.c.b16 %v1202, %v1201
    %v1224 = vpack.c.b16 %v1204, %v1203
    %v1225 = vpack.c.b16 %v1206, %v1205
    %v1226 = vpack.c.b16 %v1208, %v1207
    %v1227 = vpack.c.b16 %v1210, %v1209
    %v1228 = vpack.c.b16 %v1212, %v1211
    %1245 = vmatprep.subr.bf16.mxu0 0
    %1246 = vmatpush1.bf16.msra.mxu0 %v1213
    %1247 = vmatprep.subr.bf16.mxu0 0
    %1248 = vmatpush1.bf16.msra.mxu0 %v1214
    %1249 = vmatprep.subr.bf16.mxu0 0
    %1250 = vmatpush1.bf16.msra.mxu0 %v1215
    %1251 = vmatprep.subr.bf16.mxu0 0
    %1252 = vmatpush1.bf16.msra.mxu0 %v1216
    %1253 = vmatprep.subr.bf16.mxu0 0
    %1254 = vmatpush1.bf16.msra.mxu0 %v1217
    %1255 = vmatprep.subr.bf16.mxu0 0
    %1256 = vmatpush1.bf16.msra.mxu0 %v1218
    %1257 = vmatprep.subr.bf16.mxu0 0
    %1258 = vmatpush1.bf16.msra.mxu0 %v1219
    %1259 = vmatprep.subr.bf16.mxu0 0
    %1260 = vmatpush1.bf16.msra.mxu0 %v1220
    %1261 = vmatprep.subr.bf16.mxu0 0
    %1262 = vmatpush1.bf16.msra.mxu0 %v1221
    %1263 = vmatprep.subr.bf16.mxu0 0
    %1264 = vmatpush1.bf16.msra.mxu0 %v1222
    %1265 = vmatprep.subr.bf16.mxu0 0
    %1266 = vmatpush1.bf16.msra.mxu0 %v1223
    %1267 = vmatprep.subr.bf16.mxu0 0
    %1268 = vmatpush1.bf16.msra.mxu0 %v1224
    %1269 = vmatprep.subr.bf16.mxu0 0
    %1270 = vmatpush1.bf16.msra.mxu0 %v1225
    %1271 = vmatprep.subr.bf16.mxu0 0
    %1272 = vmatpush1.bf16.msra.mxu0 %v1226
    %1273 = vmatprep.subr.bf16.mxu0 0
    %1274 = vmatpush1.bf16.msra.mxu0 %v1227
    %1275 = vmatprep.subr.bf16.mxu0 0
    %1276 = vmatpush1.bf16.msra.mxu0 %v1228
    %1277 = vmatprep.mubr.bf16.mxu0 %v1110
    %1278 = vmatmul.mubr.bf16.gmra.mrb[0].mxu0 %v1109
    %v1279 = vpop.f32.mrb[0].mxu0
    %v1280 = vadd.f32 %v1148, %v1279
    %v1281 = vpop.f32.mrb[0].mxu0
    %v1282 = vpop.f32.mrb[0].mxu0
    %v1283 = vpop.f32.mrb[0].mxu0
    %1284 = vdwg.mxu0
    %v1285 = vmax.f32 %v1280, 0.0
    %v1286 = vmin.f32 %v1285, 8.0
    %v1287 = vpack.c.bf16 %v1286, %v1286
    %v1288 = vpack.c.bf16 %v1144, %v1143
    %v1290 = vpack.i.b16 %v1288, %v1288
    %v1292 = vlaneseq
    %v1293 = vshrl.u32 %v1292, 7
    %v1294 = vsub.s32 1, %v1293
    %v1295 = vrot.slane %v1290, %v1294
    %v1296 = vmul.bf16 %v1295, %v1287
    %v1297 = vshrl.u32 %v1288, 16
    %v1298 = vpack.i.b16 %v1297, %v1297
    %v1300 = vlaneseq
    %v1301 = vshrl.u32 %v1300, 7
    %v1302 = vsub.s32 0, %v1301
    %v1303 = vrot.slane %v1298, %v1302
    %v1304 = vadd.bf16 %v1303, %v1296
    %v1305 = vsub.bf16 %v1287, 1065369472
    %v1306 = vmax.bf16 %v1305, 0
    %v1307 = vlaneseq
    %v1308 = vshrl.u32 %v1307, 7
    %v1309 = vsub.s32 1, %v1308
    %v1310 = vrot.slane %v1298, %v1309
    %v1311 = vmul.bf16 %v1310, %v1306
    %v1312 = vadd.bf16 %v1304, %v1311
    %v1313 = vsub.bf16 %v1287, 1073758208
    %v1314 = vmax.bf16 %v1313, 0
    %v1315 = vlaneseq
    %v1316 = vshrl.u32 %v1315, 7
    %v1317 = vsub.s32 2, %v1316
    %v1318 = vrot.slane %v1290, %v1317
    %v1319 = vmul.bf16 %v1318, %v1314
    %v1320 = vadd.bf16 %v1312, %v1319
    %v1321 = vsub.bf16 %v1287, 1077952576
    %v1322 = vmax.bf16 %v1321, 0
    %v1323 = vlaneseq
    %v1324 = vshrl.u32 %v1323, 7
    %v1325 = vsub.s32 2, %v1324
    %v1326 = vrot.slane %v1298, %v1325
    %v1327 = vmul.bf16 %v1326, %v1322
    %v1328 = vadd.bf16 %v1320, %v1327
    %v1329 = vsub.bf16 %v1287, 1082146944
    %v1330 = vmax.bf16 %v1329, 0
    %v1331 = vlaneseq
    %v1332 = vshrl.u32 %v1331, 7
    %v1333 = vsub.s32 3, %v1332
    %v1334 = vrot.slane %v1290, %v1333
    %v1335 = vmul.bf16 %v1334, %v1330
    %v1336 = vadd.bf16 %v1328, %v1335
    %v1337 = vsub.bf16 %v1287, 1084244128
    %v1338 = vmax.bf16 %v1337, 0
    %v1339 = vlaneseq
    %v1340 = vshrl.u32 %v1339, 7
    %v1341 = vsub.s32 3, %v1340
    %v1342 = vrot.slane %v1298, %v1341
    %v1343 = vmul.bf16 %v1342, %v1338
    %v1344 = vadd.bf16 %v1336, %v1343
    %v1345 = vsub.bf16 %v1287, 1086341312
    %v1346 = vmax.bf16 %v1345, 0
    %v1347 = vlaneseq
    %v1348 = vshrl.u32 %v1347, 7
    %v1349 = vsub.s32 4, %v1348
    %v1350 = vrot.slane %v1290, %v1349
    %v1351 = vmul.bf16 %v1350, %v1346
    %v1352 = vadd.bf16 %v1344, %v1351
    %v1353 = vsub.bf16 %v1287, 1088438496
    %v1354 = vmax.bf16 %v1353, 0
    %v1355 = vlaneseq
    %v1356 = vshrl.u32 %v1355, 7
    %v1357 = vsub.s32 4, %v1356
    %v1358 = vrot.slane %v1298, %v1357
    %v1359 = vmul.bf16 %v1358, %v1354
    %v1360 = vadd.bf16 %v1352, %v1359
    %v1361 = vld [vmem:[%s5] sm:$0xf]
    %v1362 = vld [vmem:[%s5 + $0x4] sm:$0xf]
    %v1363 = vld [vmem:[%s5 + $0x8] sm:$0xf]
    %v1364 = vld [vmem:[%s5 + $0xc] sm:$0xf]
    %v1365 = vld [vmem:[%s5 + $0x10] sm:$0xf]
    %v1366 = vld [vmem:[%s5 + $0x14] sm:$0xf]
    %v1367 = vld [vmem:[%s5 + $0x18] sm:$0xf]
    %v1368 = vld [vmem:[%s5 + $0x1c] sm:$0xf]
    %v1369 = vld [vmem:[%s5 + $0x20] sm:$0xf]
    %v1370 = vld [vmem:[%s5 + $0x24] sm:$0xf]
    %v1371 = vld [vmem:[%s5 + $0x28] sm:$0xf]
    %v1372 = vld [vmem:[%s5 + $0x2c] sm:$0xf]
    %v1373 = vld [vmem:[%s5 + $0x30] sm:$0xf]
    %v1374 = vld [vmem:[%s5 + $0x34] sm:$0xf]
    %v1375 = vld [vmem:[%s5 + $0x38] sm:$0xf]
    %v1376 = vld [vmem:[%s5 + $0x3c] sm:$0xf]
    %v1377 = vld [vmem:[#allocation7] sm:$0xff]
    %v1378 = vld [vmem:[#allocation7 + $0x8] sm:$0x3]
    %v1379 = vlaneseq
    %v1380 = vshrl.u32 %v1379, 7
    %v1381 = vsub.s32 0, %v1380
    %v1382 = vrot.slane %v1377, %v1381
    %v1399 = vunpack.c.l.b16 %v1361
    %v1400 = vunpack.c.l.b16 %v1362
    %v1401 = vunpack.c.l.b16 %v1363
    %v1402 = vunpack.c.l.b16 %v1364
    %v1403 = vunpack.c.l.b16 %v1365
    %v1404 = vunpack.c.l.b16 %v1366
    %v1405 = vunpack.c.l.b16 %v1367
    %v1406 = vunpack.c.l.b16 %v1368
    %v1407 = vunpack.c.l.b16 %v1369
    %v1408 = vunpack.c.l.b16 %v1370
    %v1409 = vunpack.c.l.b16 %v1371
    %v1410 = vunpack.c.l.b16 %v1372
    %v1411 = vunpack.c.l.b16 %v1373
    %v1412 = vunpack.c.l.b16 %v1374
    %v1413 = vunpack.c.l.b16 %v1375
    %v1414 = vunpack.c.l.b16 %v1376
    %v1415 = vpack.c.b16 %v1400, %v1399
    %v1416 = vpack.c.b16 %v1402, %v1401
    %v1417 = vpack.c.b16 %v1404, %v1403
    %v1418 = vpack.c.b16 %v1406, %v1405
    %v1419 = vpack.c.b16 %v1408, %v1407
    %v1420 = vpack.c.b16 %v1410, %v1409
    %v1421 = vpack.c.b16 %v1412, %v1411
    %v1422 = vpack.c.b16 %v1414, %v1413
    %1431 = vmatprep.subr.bf16.mxu0 0
    %1432 = vmatpush1.bf16.msra.mxu0 %v1415
    %1433 = vmatprep.subr.bf16.mxu0 0
    %1434 = vmatpush1.bf16.msra.mxu0 %v1416
    %1435 = vmatprep.subr.bf16.mxu0 0
    %1436 = vmatpush1.bf16.msra.mxu0 %v1417
    %1437 = vmatprep.subr.bf16.mxu0 0
    %1438 = vmatpush1.bf16.msra.mxu0 %v1418
    %1439 = vmatprep.subr.bf16.mxu0 0
    %1440 = vmatpush1.bf16.msra.mxu0 %v1419
    %1441 = vmatprep.subr.bf16.mxu0 0
    %1442 = vmatpush1.bf16.msra.mxu0 %v1420
    %1443 = vmatprep.subr.bf16.mxu0 0
    %1444 = vmatpush1.bf16.msra.mxu0 %v1421
    %1445 = vmatprep.subr.bf16.mxu0 0
    %1446 = vmatpush1.bf16.msra.mxu0 %v1422
    %1447 = vmatprep.subr.bf16.mxu0 0
    %1448 = vmatpush1.bf16.msra.mxu0 0
    %1449 = vmatprep.subr.bf16.mxu0 0
    %1450 = vmatpush1.bf16.msra.mxu0 0
    %1451 = vmatprep.subr.bf16.mxu0 0
    %1452 = vmatpush1.bf16.msra.mxu0 0
    %1453 = vmatprep.subr.bf16.mxu0 0
    %1454 = vmatpush1.bf16.msra.mxu0 0
    %1455 = vmatprep.subr.bf16.mxu0 0
    %1456 = vmatpush1.bf16.msra.mxu0 0
    %1457 = vmatprep.subr.bf16.mxu0 0
    %1458 = vmatpush1.bf16.msra.mxu0 0
    %1459 = vmatprep.subr.bf16.mxu0 0
    %1460 = vmatpush1.bf16.msra.mxu0 0
    %1461 = vmatprep.subr.bf16.mxu0 0
    %1462 = vmatpush1.bf16.msra.mxu0 0
    %1463 = vmatprep.mubr.bf16.mxu0 0
    %1464 = vmatmul.mubr.bf16.gmra.mrb[0].mxu0 %v1360
    %v1465 = vpop.f32.mrb[0].mxu0
    %v1466 = vadd.f32 %v1382, %v1465
    %v1467 = vpop.f32.mrb[0].mxu0
    %v1468 = vpop.f32.mrb[0].mxu0
    %v1469 = vpop.f32.mrb[0].mxu0
    %1470 = vdwg.mxu0
    %v1471 = vmax.f32 %v1466, 0.0
    %v1472 = vmin.f32 %v1471, 8.0
    %v1473 = vpack.c.bf16 %v1472, %v1472
    %v1474 = vpack.c.bf16 %v1378, %v1377
    %v1476 = vpack.i.b16 %v1474, %v1474
    %v1478 = vlaneseq
    %v1479 = vshrl.u32 %v1478, 7
    %v1480 = vsub.s32 1, %v1479
    %v1481 = vrot.slane %v1476, %v1480
    %v1482 = vmul.bf16 %v1481, %v1473
    %v1483 = vshrl.u32 %v1474, 16
    %v1484 = vpack.i.b16 %v1483, %v1483
    %v1486 = vlaneseq
    %v1487 = vshrl.u32 %v1486, 7
    %v1488 = vsub.s32 0, %v1487
    %v1489 = vrot.slane %v1484, %v1488
    %v1490 = vadd.bf16 %v1489, %v1482
    %v1491 = vsub.bf16 %v1473, 1065369472
    %v1492 = vmax.bf16 %v1491, 0
    %v1493 = vlaneseq
    %v1494 = vshrl.u32 %v1493, 7
    %v1495 = vsub.s32 1, %v1494
    %v1496 = vrot.slane %v1484, %v1495
    %v1497 = vmul.bf16 %v1496, %v1492
    %v1498 = vadd.bf16 %v1490, %v1497
    %v1499 = vsub.bf16 %v1473, 1073758208
    %v1500 = vmax.bf16 %v1499, 0
    %v1501 = vlaneseq
    %v1502 = vshrl.u32 %v1501, 7
    %v1503 = vsub.s32 2, %v1502
    %v1504 = vrot.slane %v1476, %v1503
    %v1505 = vmul.bf16 %v1504, %v1500
    %v1506 = vadd.bf16 %v1498, %v1505
    %v1507 = vsub.bf16 %v1473, 1077952576
    %v1508 = vmax.bf16 %v1507, 0
    %v1509 = vlaneseq
    %v1510 = vshrl.u32 %v1509, 7
    %v1511 = vsub.s32 2, %v1510
    %v1512 = vrot.slane %v1484, %v1511
    %v1513 = vmul.bf16 %v1512, %v1508
    %v1514 = vadd.bf16 %v1506, %v1513
    %v1515 = vsub.bf16 %v1473, 1082146944
    %v1516 = vmax.bf16 %v1515, 0
    %v1517 = vlaneseq
    %v1518 = vshrl.u32 %v1517, 7
    %v1519 = vsub.s32 3, %v1518
    %v1520 = vrot.slane %v1476, %v1519
    %v1521 = vmul.bf16 %v1520, %v1516
    %v1522 = vadd.bf16 %v1514, %v1521
    %v1523 = vsub.bf16 %v1473, 1084244128
    %v1524 = vmax.bf16 %v1523, 0
    %v1525 = vlaneseq
    %v1526 = vshrl.u32 %v1525, 7
    %v1527 = vsub.s32 3, %v1526
    %v1528 = vrot.slane %v1484, %v1527
    %v1529 = vmul.bf16 %v1528, %v1524
    %v1530 = vadd.bf16 %v1522, %v1529
    %v1531 = vsub.bf16 %v1473, 1086341312
    %v1532 = vmax.bf16 %v1531, 0
    %v1533 = vlaneseq
    %v1534 = vshrl.u32 %v1533, 7
    %v1535 = vsub.s32 4, %v1534
    %v1536 = vrot.slane %v1476, %v1535
    %v1537 = vmul.bf16 %v1536, %v1532
    %v1538 = vadd.bf16 %v1530, %v1537
    %v1539 = vsub.bf16 %v1473, 1088438496
    %v1540 = vmax.bf16 %v1539, 0
    %v1541 = vlaneseq
    %v1542 = vshrl.u32 %v1541, 7
    %v1543 = vsub.s32 4, %v1542
    %v1544 = vrot.slane %v1484, %v1543
    %v1545 = vmul.bf16 %v1544, %v1540
    %v1546 = vadd.bf16 %v1538, %v1545
    %v1547 = vld [vmem:[%s7] sm:$0xf]
    %v1548 = vld [vmem:[%s7 + $0x4] sm:$0xf]
    %v1549 = vld [vmem:[%s7 + $0x8] sm:$0xf]
    %v1550 = vld [vmem:[%s7 + $0xc] sm:$0xf]
    %v1551 = vld [vmem:[%s7 + $0x10] sm:$0xf]
    %v1552 = vld [vmem:[%s7 + $0x14] sm:$0xf]
    %v1553 = vld [vmem:[%s7 + $0x18] sm:$0xf]
    %v1554 = vld [vmem:[%s7 + $0x1c] sm:$0xf]
    %v1555 = vld [vmem:[%s8] sm:$0x1]
    %v1557 = vlaneseq
    %v1558 = vshrl.u32 %v1557, 7
    %v1559 = vsub.s32 0, %v1558
    %v1560 = vrot.slane %v1555, %v1559
    %v1570 = vunpack.c.l.b16 %v1547
    %v1571 = vunpack.c.l.b16 %v1548
    %v1572 = vunpack.c.l.b16 %v1549
    %v1573 = vunpack.c.l.b16 %v1550
    %v1574 = vunpack.c.l.b16 %v1551
    %v1575 = vunpack.c.l.b16 %v1552
    %v1576 = vunpack.c.l.b16 %v1553
    %v1577 = vunpack.c.l.b16 %v1554
    %v1578 = vpack.c.b16 %v1571, %v1570
    %v1579 = vpack.c.b16 %v1573, %v1572
    %v1580 = vpack.c.b16 %v1575, %v1574
    %v1581 = vpack.c.b16 %v1577, %v1576
    %vm1586 = vcmask 523264
    %v1588 = vsel %vm1586, %v1546, 0
    %1590 = vmatprep.subr.bf16.mxu0 0
    %1591 = vmatpush1.bf16.msra.mxu0 %v1578
    %1592 = vmatprep.subr.bf16.mxu0 0
    %1593 = vmatpush1.bf16.msra.mxu0 %v1579
    %1594 = vmatprep.subr.bf16.mxu0 0
    %1595 = vmatpush1.bf16.msra.mxu0 %v1580
    %1596 = vmatprep.subr.bf16.mxu0 0
    %1597 = vmatpush1.bf16.msra.mxu0 %v1581
    %1598 = vmatprep.subr.bf16.mxu0 0
    %1599 = vmatpush1.bf16.msra.mxu0 0
    %1600 = vmatprep.subr.bf16.mxu0 0
    %1601 = vmatpush1.bf16.msra.mxu0 0
    %1602 = vmatprep.subr.bf16.mxu0 0
    %1603 = vmatpush1.bf16.msra.mxu0 0
    %1604 = vmatprep.subr.bf16.mxu0 0
    %1605 = vmatpush1.bf16.msra.mxu0 0
    %1606 = vmatprep.subr.bf16.mxu0 0
    %1607 = vmatpush1.bf16.msra.mxu0 0
    %1608 = vmatprep.subr.bf16.mxu0 0
    %1609 = vmatpush1.bf16.msra.mxu0 0
    %1610 = vmatprep.subr.bf16.mxu0 0
    %1611 = vmatpush1.bf16.msra.mxu0 0
    %1612 = vmatprep.subr.bf16.mxu0 0
    %1613 = vmatpush1.bf16.msra.mxu0 0
    %1614 = vmatprep.subr.bf16.mxu0 0
    %1615 = vmatpush1.bf16.msra.mxu0 0
    %1616 = vmatprep.subr.bf16.mxu0 0
    %1617 = vmatpush1.bf16.msra.mxu0 0
    %1618 = vmatprep.subr.bf16.mxu0 0
    %1619 = vmatpush1.bf16.msra.mxu0 0
    %1620 = vmatprep.subr.bf16.mxu0 0
    %1621 = vmatpush1.bf16.msra.mxu0 0
    %1622 = vmatprep.mubr.bf16.mxu0 0
    %1623 = vmatmul.mubr.bf16.gmra.mrb[0].mxu0 %v1588
    %v1624 = vpop.f32.mrb[0].mxu0
    %v1625 = vadd.f32 %v1560, %v1624
    %v1626 = vpop.f32.mrb[0].mxu0
    %v1627 = vpop.f32.mrb[0].mxu0
    %v1628 = vpop.f32.mrb[0].mxu0
    %1629 = vdwg.mxu0
    %1630 = vmax.xlane.f32.xlu0 %v1625
    %v1631 = vpop.xlane.xlu0 %1630
    %v1632 = vsub.f32 %v1625, %v1631
    %v1633 = vmul.f32 %v1632, 1.442695
    %v1634 = vpow.pop %v1633
    %1635 = vadd.xlane.f32.xlu0 %v1634
    %v1636 = vpop.xlane.xlu0 %1635
    %v1637 = vlog2.pop %v1636
    %v1638 = vmul.f32 %v1637, 0.6931472
    %v1639 = vsub.f32 %v1632, %v1638
    %v1640 = vpack.c.bf16 %v1639, %v1639
    %1641 = vst [vmem:[#allocation8] sm:$0xf] %v1640
    // Predicated region
    $region50: #{tpu_custom_call.1} parent=1 // pred_check
      _
    $region51: #{tpu_custom_call.1} parent=1 // pred_check_branch
      %1643 = sbr.rel (0) target = $region53
    $region52: #{tpu_custom_call.1} parent=1 // pred_region
      %s1645 = ssub.s32 64, 64
      %1646 = vsyncadd [#allocation4], %s1645
      %s1648 = sshll.u32 [#allocation8], 4
      %s1649 = int_to_ptr.vmem [resolvable:$true] %s1648
      %1651 = dma.vmem_to_hbm [thread:$0]  %s1649, 64, %s9, [#allocation4]
    $region53: #{tpu_custom_call.1} parent=1 // pred_fallthru
      _
    // Predicated region
    $region54: #{tpu_custom_call.1} parent=1 // pred_check
      _
    $region55: #{tpu_custom_call.1} parent=1 // pred_check_branch
      %1653 = sbr.rel (0) target = $region57
    $region56: #{tpu_custom_call.1} parent=1 // pred_region
      %1654 = dma.done [#allocation4], 64
    $region57: #{tpu_custom_call.1} parent=1 // pred_fallthru
      _
    %1655 = vsyncpa [#allocation3], 1
    %1656 = vsyncpa [#allocation6], 1
    %1657 = vsyncpa [#allocation4], 1

</llo_original>
